<compile_context>
chip_gen: v5e
topology: v5e:2x2
jax: 0.10.0
libtpu: 0.0.40
codegen_flags: <defaults>
</compile_context>

<pallas_src>
import functools

import jax
import jax.numpy as jnp
from jax import lax
from jax.experimental import pallas as pl
from jax.experimental.pallas import tpu as pltpu


def _make_dropblock_kernel(H, W, cbs, gamma, numel):
    """Build the DropBlock kernel with all scalars baked in as constants."""
    p = cbs // 2

    def kernel(x_ref, noise_ref, o_ref, padw_ref, padh_ref):
        # x_ref / noise_ref / o_ref : (H, W, Npad)   channels on the lane axis
        # padw_ref : (H, W + 2p, Npad) f32 scratch   (W-direction halo)
        # padh_ref : (H + 2p, W, Npad) f32 scratch   (H-direction halo)
        noise = noise_ref[...].astype(jnp.float32)
        seed = (noise < gamma).astype(jnp.float32)          # 1 = block seed

        # ---- separable max-pool, kernel=cbs, stride=1, zero padding ----
        # (zero padding == -inf padding here because the mask is in {0,1} and
        #  the window always contains at least one in-bounds element)
        # pool along W
        padw_ref[...] = jnp.zeros_like(padw_ref)
        padw_ref[:, p:p + W, :] = seed
        pooled_w = seed                                      # dw == p tap
        for dw in range(cbs):
            if dw == p:
                continue
            pooled_w = jnp.maximum(pooled_w, padw_ref[:, dw:dw + W, :])
        # pool along H
        padh_ref[...] = jnp.zeros_like(padh_ref)
        padh_ref[p:p + H, :, :] = pooled_w
        drop = pooled_w                                      # dh == p tap
        for dh in range(cbs):
            if dh == p:
                continue
            drop = jnp.maximum(drop, padh_ref[dh:dh + H, :, :])

        keep = 1.0 - drop                                    # padded lanes -> 0
        total = jnp.sum(keep)                                # exact (0/1 sums)
        scale = numel / (total + 1e-7)

        x = x_ref[...].astype(jnp.float32)
        o_ref[...] = (x * keep * scale).astype(o_ref.dtype)

    return kernel


@functools.partial(
    jax.jit,
    static_argnames=("drop_prob", "block_size", "gamma_scale", "training"),
)
def dropblock2d_forward(x, noise, *, drop_prob=0.1, block_size=7,
                        gamma_scale=1.0, training=True):
    """DropBlock2d forward. x, noise: (B, C, H, W). Returns (B, C, H, W)."""
    if not training or drop_prob == 0.0:
        return x

    B, C, H, W = x.shape
    N = B * C
    cbs = min(block_size, min(H, W))
    assert cbs % 2 == 1, "even clipped block size not supported"
    p = cbs // 2

    gamma = (float(gamma_scale) * float(drop_prob) * float(H * W)
             / float(cbs ** 2)
             / float((W - block_size + 1) * (H - block_size + 1)))
    numel = float(B * C * H * W)

    # Channels-last layout, lane-dense channel axis (multiple of 128).
    LANE = 128
    Npad = ((N + LANE - 1) // LANE) * LANE
    x_t = jnp.transpose(x.reshape(N, H, W), (1, 2, 0))        # (H, W, N)
    n_t = jnp.transpose(noise.reshape(N, H, W), (1, 2, 0))    # (H, W, N)
    if Npad != N:
        x_t = jnp.pad(x_t, ((0, 0), (0, 0), (0, Npad - N)))
        # noise = -1 < gamma  => seed=1 => keep=0 in the padding: contributes
        # nothing to the normalization sum or the output.
        n_t = jnp.pad(n_t, ((0, 0), (0, 0), (0, Npad - N)),
                      constant_values=-1.0)

    kernel = _make_dropblock_kernel(H, W, cbs, gamma, numel)

    out = pl.pallas_call(
        kernel,
        out_shape=jax.ShapeDtypeStruct((H, W, Npad), x.dtype),
        grid_spec=pltpu.PrefetchScalarGridSpec(
            num_scalar_prefetch=0,
            grid=(1,),
            in_specs=[
                pl.BlockSpec((H, W, Npad), lambda i: (0, 0, 0)),   # x
                pl.BlockSpec((H, W, Npad), lambda i: (0, 0, 0)),   # noise
            ],
            out_specs=pl.BlockSpec((H, W, Npad), lambda i: (0, 0, 0)),
            scratch_shapes=[
                pltpu.VMEM((H, W + 2 * p, Npad), jnp.float32),
                pltpu.VMEM((H + 2 * p, W, Npad), jnp.float32),
            ],
        ),
        compiler_params=pltpu.CompilerParams(
            dimension_semantics=("arbitrary",),
        ),
    )(x_t, n_t)

    out = out[:, :, :N]                                       # drop lane padding
    return jnp.transpose(out, (2, 0, 1)).reshape(B, C, H, W)


def drop_block_fast_2d_reference(x, noise, drop_prob, block_size, gamma_scale):
    """Pure-JAX reference mirroring torch drop_block_fast_2d (same noise)."""
    B, C, H, W = x.shape
    cbs = min(block_size, min(H, W))
    p = cbs // 2
    gamma = (gamma_scale * drop_prob * (H * W) / (cbs ** 2)
             / ((W - block_size + 1) * (H - block_size + 1)))
    seed = (noise < gamma).astype(jnp.float32)
    drop = lax.reduce_window(
        seed, -jnp.inf, lax.max,
        window_dimensions=(1, 1, cbs, cbs),
        window_strides=(1, 1, 1, 1),
        padding=((0, 0), (0, 0), (p, p), (p, p)))
    keep = 1.0 - drop
    scale = keep.size / (jnp.sum(keep) + 1e-7)
    return (x.astype(jnp.float32) * keep * scale).astype(x.dtype)


if __name__ == "__main__":
    # Small shapes consistent with the module: (B, C, H, W) = (2, 4, 16, 16)
    B, C, H, W = 2, 4, 16, 16
    drop_prob, block_size, gamma_scale = 0.1, 7, 1.0

    key = jax.random.PRNGKey(0)
    kx, kn = jax.random.split(key, 2)
    x = jax.random.normal(kx, (B, C, H, W), dtype=jnp.float32)
    noise = jax.random.uniform(kn, (B, C, H, W), dtype=jnp.float32)

    y = dropblock2d_forward(x, noise, drop_prob=drop_prob,
                            block_size=block_size, gamma_scale=gamma_scale,
                            training=True)
    y = jax.block_until_ready(y)

    y_ref = drop_block_fast_2d_reference(x, noise, drop_prob, block_size,
                                         gamma_scale)
    assert y.shape == (B, C, H, W)
    assert jnp.allclose(y, y_ref, atol=1e-5, rtol=1e-5), "mismatch vs reference"

    # eval / drop_prob=0 path is the identity
    y_eval = dropblock2d_forward(x, noise, drop_prob=drop_prob,
                                 block_size=block_size,
                                 gamma_scale=gamma_scale, training=False)
    assert jnp.array_equal(jax.block_until_ready(y_eval), x)

    print("KERNEL_OK")
</pallas_src>

<mosaic_0001>
module attributes {stable_mosaic.version = 11 : i64} {
  func.func @kernel(%arg0: i32, %arg1: memref<16x16x128xf32, #tpu.memory_space<vmem>>, %arg2: memref<16x16x128xf32, #tpu.memory_space<vmem>>, %arg3: memref<16x16x128xf32, #tpu.memory_space<vmem>>, %arg4: memref<16x22x128xf32, #tpu.memory_space<vmem>>, %arg5: memref<22x16x128xf32, #tpu.memory_space<vmem>>) attributes {dimension_semantics = [#tpu.dimension_semantics<arbitrary>], iteration_bounds = array<i64: 1>, scalar_prefetch = 0 : i64, scratch_operands = 2 : i64, tpu.core_type = #tpu.core_type<tc>, window_params = [{pipeline_mode = #tpu.pipeline_mode<synchronous>, transform_indices = @transform_0, window_bounds = array<i64: 16, 16, 128>}, {pipeline_mode = #tpu.pipeline_mode<synchronous>, transform_indices = @transform_1, window_bounds = array<i64: 16, 16, 128>}, {pipeline_mode = #tpu.pipeline_mode<synchronous>, transform_indices = @transform_2, window_bounds = array<i64: 16, 16, 128>}]} {
    %c0 = arith.constant 0 : index
    %c0_0 = arith.constant 0 : index
    %c0_1 = arith.constant 0 : index
    %0 = vector.load %arg2[%c0, %c0_0, %c0_1] : memref<16x16x128xf32, #tpu.memory_space<vmem>>, vector<16x16x128xf32>
    %cst = arith.constant 0.00522448961 : f32
    %1 = vector.broadcast %cst : f32 to vector<16x16x128xf32>
    %2 = arith.cmpf olt, %0, %1 : vector<16x16x128xf32>
    %3 = arith.extui %2 : vector<16x16x128xi1> to vector<16x16x128xi32>
    %4 = arith.sitofp %3 : vector<16x16x128xi32> to vector<16x16x128xf32>
    %cst_2 = arith.constant 0.000000e+00 : f32
    %5 = vector.broadcast %cst_2 : f32 to vector<16x22x128xf32>
    %c0_3 = arith.constant 0 : index
    %c0_4 = arith.constant 0 : index
    %c0_5 = arith.constant 0 : index
    %6 = vector.load %arg4[%c0_3, %c0_4, %c0_5] : memref<16x22x128xf32, #tpu.memory_space<vmem>>, vector<16x22x128xf32>
    tpu.vector_store %arg4[%c0_3, %c0_4, %c0_5], %5 {strides = array<i32>} : memref<16x22x128xf32, #tpu.memory_space<vmem>>, vector<16x22x128xf32>,
    %c0_6 = arith.constant 0 : index
    %c3 = arith.constant 3 : index
    %c0_7 = arith.constant 0 : index
    %7 = vector.load %arg4[%c0_6, %c3, %c0_7] : memref<16x22x128xf32, #tpu.memory_space<vmem>>, vector<16x16x128xf32>
    tpu.vector_store %arg4[%c0_6, %c3, %c0_7], %4 {strides = array<i32>} : memref<16x22x128xf32, #tpu.memory_space<vmem>>, vector<16x16x128xf32>,
    %c0_8 = arith.constant 0 : index
    %c0_9 = arith.constant 0 : index
    %c0_10 = arith.constant 0 : index
    %8 = vector.load %arg4[%c0_8, %c0_9, %c0_10] : memref<16x22x128xf32, #tpu.memory_space<vmem>>, vector<16x16x128xf32>
    %9 = arith.maximumf %4, %8 : vector<16x16x128xf32>
    %c0_11 = arith.constant 0 : index
    %c1 = arith.constant 1 : index
    %c0_12 = arith.constant 0 : index
    %10 = vector.load %arg4[%c0_11, %c1, %c0_12] : memref<16x22x128xf32, #tpu.memory_space<vmem>>, vector<16x16x128xf32>
    %11 = arith.maximumf %9, %10 : vector<16x16x128xf32>
    %c0_13 = arith.constant 0 : index
    %c2 = arith.constant 2 : index
    %c0_14 = arith.constant 0 : index
    %12 = vector.load %arg4[%c0_13, %c2, %c0_14] : memref<16x22x128xf32, #tpu.memory_space<vmem>>, vector<16x16x128xf32>
    %13 = arith.maximumf %11, %12 : vector<16x16x128xf32>
    %c0_15 = arith.constant 0 : index
    %c4 = arith.constant 4 : index
    %c0_16 = arith.constant 0 : index
    %14 = vector.load %arg4[%c0_15, %c4, %c0_16] : memref<16x22x128xf32, #tpu.memory_space<vmem>>, vector<16x16x128xf32>
    %15 = arith.maximumf %13, %14 : vector<16x16x128xf32>
    %c0_17 = arith.constant 0 : index
    %c5 = arith.constant 5 : index
    %c0_18 = arith.constant 0 : index
    %16 = vector.load %arg4[%c0_17, %c5, %c0_18] : memref<16x22x128xf32, #tpu.memory_space<vmem>>, vector<16x16x128xf32>
    %17 = arith.maximumf %15, %16 : vector<16x16x128xf32>
    %c0_19 = arith.constant 0 : index
    %c6 = arith.constant 6 : index
    %c0_20 = arith.constant 0 : index
    %18 = vector.load %arg4[%c0_19, %c6, %c0_20] : memref<16x22x128xf32, #tpu.memory_space<vmem>>, vector<16x16x128xf32>
    %19 = arith.maximumf %17, %18 : vector<16x16x128xf32>
    %cst_21 = arith.constant 0.000000e+00 : f32
    %20 = vector.broadcast %cst_21 : f32 to vector<22x16x128xf32>
    %c0_22 = arith.constant 0 : index
    %c0_23 = arith.constant 0 : index
    %c0_24 = arith.constant 0 : index
    %21 = vector.load %arg5[%c0_22, %c0_23, %c0_24] : memref<22x16x128xf32, #tpu.memory_space<vmem>>, vector<22x16x128xf32>
    tpu.vector_store %arg5[%c0_22, %c0_23, %c0_24], %20 {strides = array<i32>} : memref<22x16x128xf32, #tpu.memory_space<vmem>>, vector<22x16x128xf32>,
    %c3_25 = arith.constant 3 : index
    %c0_26 = arith.constant 0 : index
    %c0_27 = arith.constant 0 : index
    %22 = vector.load %arg5[%c3_25, %c0_26, %c0_27] : memref<22x16x128xf32, #tpu.memory_space<vmem>>, vector<16x16x128xf32>
    tpu.vector_store %arg5[%c3_25, %c0_26, %c0_27], %19 {strides = array<i32>} : memref<22x16x128xf32, #tpu.memory_space<vmem>>, vector<16x16x128xf32>,
    %c0_28 = arith.constant 0 : index
    %c0_29 = arith.constant 0 : index
    %c0_30 = arith.constant 0 : index
    %23 = vector.load %arg5[%c0_28, %c0_29, %c0_30] : memref<22x16x128xf32, #tpu.memory_space<vmem>>, vector<16x16x128xf32>
    %24 = arith.maximumf %19, %23 : vector<16x16x128xf32>
    %c1_31 = arith.constant 1 : index
    %c0_32 = arith.constant 0 : index
    %c0_33 = arith.constant 0 : index
    %25 = vector.load %arg5[%c1_31, %c0_32, %c0_33] : memref<22x16x128xf32, #tpu.memory_space<vmem>>, vector<16x16x128xf32>
    %26 = arith.maximumf %24, %25 : vector<16x16x128xf32>
    %c2_34 = arith.constant 2 : index
    %c0_35 = arith.constant 0 : index
    %c0_36 = arith.constant 0 : index
    %27 = vector.load %arg5[%c2_34, %c0_35, %c0_36] : memref<22x16x128xf32, #tpu.memory_space<vmem>>, vector<16x16x128xf32>
    %28 = arith.maximumf %26, %27 : vector<16x16x128xf32>
    %c4_37 = arith.constant 4 : index
    %c0_38 = arith.constant 0 : index
    %c0_39 = arith.constant 0 : index
    %29 = vector.load %arg5[%c4_37, %c0_38, %c0_39] : memref<22x16x128xf32, #tpu.memory_space<vmem>>, vector<16x16x128xf32>
    %30 = arith.maximumf %28, %29 : vector<16x16x128xf32>
    %c5_40 = arith.constant 5 : index
    %c0_41 = arith.constant 0 : index
    %c0_42 = arith.constant 0 : index
    %31 = vector.load %arg5[%c5_40, %c0_41, %c0_42] : memref<22x16x128xf32, #tpu.memory_space<vmem>>, vector<16x16x128xf32>
    %32 = arith.maximumf %30, %31 : vector<16x16x128xf32>
    %c6_43 = arith.constant 6 : index
    %c0_44 = arith.constant 0 : index
    %c0_45 = arith.constant 0 : index
    %33 = vector.load %arg5[%c6_43, %c0_44, %c0_45] : memref<22x16x128xf32, #tpu.memory_space<vmem>>, vector<16x16x128xf32>
    %34 = arith.maximumf %32, %33 : vector<16x16x128xf32>
    %cst_46 = arith.constant 1.000000e+00 : f32
    %35 = vector.broadcast %cst_46 : f32 to vector<16x16x128xf32>
    %36 = arith.subf %35, %34 : vector<16x16x128xf32>
    %37 = vector.shape_cast %36 : vector<16x16x128xf32> to vector<1x16x16x128xf32>
    %cst_47 = arith.constant dense<0.000000e+00> : vector<1xf32>
    %38 = vector.multi_reduction <add>, %37, %cst_47 [1, 2, 3] : vector<1x16x16x128xf32> to vector<1xf32>
    %39 = vector.shape_cast %38 : vector<1xf32> to vector<1x1x1x1xf32>
    %40 = vector.extract %39[0, 0, 0, 0] : f32 from vector<1x1x1x1xf32>
    %cst_48 = arith.constant 1.000000e-07 : f32
    %41 = arith.addf %40, %cst_48 : f32
    %cst_49 = arith.constant 2.048000e+03 : f32
    %42 = arith.divf %cst_49, %41 : f32
    %c0_50 = arith.constant 0 : index
    %c0_51 = arith.constant 0 : index
    %c0_52 = arith.constant 0 : index
    %43 = vector.load %arg1[%c0_50, %c0_51, %c0_52] : memref<16x16x128xf32, #tpu.memory_space<vmem>>, vector<16x16x128xf32>
    %44 = arith.mulf %43, %36 : vector<16x16x128xf32>
    %45 = vector.broadcast %42 : f32 to vector<16x16x128xf32>
    %46 = arith.mulf %44, %45 : vector<16x16x128xf32>
    %c0_53 = arith.constant 0 : index
    %c0_54 = arith.constant 0 : index
    %c0_55 = arith.constant 0 : index
    %47 = vector.load %arg3[%c0_53, %c0_54, %c0_55] : memref<16x16x128xf32, #tpu.memory_space<vmem>>, vector<16x16x128xf32>
    tpu.vector_store %arg3[%c0_53, %c0_54, %c0_55], %46 {strides = array<i32>} : memref<16x16x128xf32, #tpu.memory_space<vmem>>, vector<16x16x128xf32>,
    return
  }
  func.func @transform_0(%arg0: i32) -> (i32, i32, i32) {
    %c0_i32 = arith.constant 0 : i32
    %c0_i32_0 = arith.constant 0 : i32
    %c0_i32_1 = arith.constant 0 : i32
    %c0_i32_2 = arith.constant 0 : i32
    return %c0_i32, %c0_i32_0, %c0_i32_1 : i32, i32, i32
  }
  func.func @transform_1(%arg0: i32) -> (i32, i32, i32) {
    %c0_i32 = arith.constant 0 : i32
    %c0_i32_0 = arith.constant 0 : i32
    %c0_i32_1 = arith.constant 0 : i32
    %c0_i32_2 = arith.constant 0 : i32
    return %c0_i32, %c0_i32_0, %c0_i32_1 : i32, i32, i32
  }
  func.func @transform_2(%arg0: i32) -> (i32, i32, i32) {
    %c0_i32 = arith.constant 0 : i32
    %c0_i32_0 = arith.constant 0 : i32
    %c0_i32_1 = arith.constant 0 : i32
    %c0_i32_2 = arith.constant 0 : i32
    return %c0_i32, %c0_i32_0, %c0_i32_1 : i32, i32, i32
  }
}

</mosaic_0001>

<llo_original>
// kernel: dropblock2d_forward.1
$region0: #{dropblock2d_forward.1}
  #allocation0 [shape = 'u32[]', space=smem, size = 0x4, offset = 0x4, fixed_abs, tag = 'smem constant byte address 0x4 - core index']
  #allocation1 [shape = 'u32[72,128]{1,0:T(1,128)}', space=vmem, size = 0x9000, scoped, tag = 'internal scratch']
  #allocation2 [shape = 'f32[16,22,128]{2,1,0:T(8,128)}', space=vmem, size = 0x30000, scoped, tag = 'scratch operand']
  #allocation3 [shape = 'f32[22,16,128]{2,1,0:T(8,128)}', space=vmem, size = 0x2c000, scoped, tag = 'scratch operand']
  %s0 = inlined_call_operand.vmem [shape: f32[16,16,128], index: 0, kind: input, shape index: {}]
  %s1 = inlined_call_operand.vmem [shape: f32[16,16,128], index: 1, kind: input, shape index: {}]
  %s2 = inlined_call_operand.vmem [shape: f32[16,16,128], index: 2, kind: output, shape index: {}]
  %s3 = sld [smem:[#allocation0]]
  $region18: #{dropblock2d_forward.1} parent=0
    _
  %s5 = ssub.s32 1, %s3
  %s6 = scalar_select 0, %s5, %s3
  // Predicated region
  $region2: #{dropblock2d_forward.1} parent=0 // pred_check
    _
  $region3: #{dropblock2d_forward.1} parent=0 // pred_check_branch
    %8 = sbr.rel (0) target = $region5
  $region4: #{dropblock2d_forward.1} parent=0 // pred_region
    _
  $region5: #{dropblock2d_forward.1} parent=0 // pred_fallthru
    _
  // Predicated region
  $region6: #{dropblock2d_forward.1} parent=0 // pred_check
    _
  $region7: #{dropblock2d_forward.1} parent=0 // pred_check_branch
    %10 = sbr.rel (0) target = $region9
  $region8: #{dropblock2d_forward.1} parent=0 // pred_region
    _
  $region9: #{dropblock2d_forward.1} parent=0 // pred_fallthru
    _
  %v11 = vld [vmem:[%s1] sm:$0xff]
  %v12 = vld [vmem:[%s1 + $0x8] sm:$0xff]
  %v13 = vld [vmem:[%s1 + $0x10] sm:$0xff]
  %v14 = vld [vmem:[%s1 + $0x18] sm:$0xff]
  %v15 = vld [vmem:[%s1 + $0x20] sm:$0xff]
  %v16 = vld [vmem:[%s1 + $0x28] sm:$0xff]
  %v17 = vld [vmem:[%s1 + $0x30] sm:$0xff]
  %v18 = vld [vmem:[%s1 + $0x38] sm:$0xff]
  %v19 = vld [vmem:[%s1 + $0x40] sm:$0xff]
  %v20 = vld [vmem:[%s1 + $0x48] sm:$0xff]
  %v21 = vld [vmem:[%s1 + $0x50] sm:$0xff]
  %v22 = vld [vmem:[%s1 + $0x58] sm:$0xff]
  %v23 = vld [vmem:[%s1 + $0x60] sm:$0xff]
  %v24 = vld [vmem:[%s1 + $0x68] sm:$0xff]
  %v25 = vld [vmem:[%s1 + $0x70] sm:$0xff]
  %v26 = vld [vmem:[%s1 + $0x78] sm:$0xff]
  %v27 = vld [vmem:[%s1 + $0x80] sm:$0xff]
  %v28 = vld [vmem:[%s1 + $0x88] sm:$0xff]
  %v29 = vld [vmem:[%s1 + $0x90] sm:$0xff]
  %v30 = vld [vmem:[%s1 + $0x98] sm:$0xff]
  %v31 = vld [vmem:[%s1 + $0xa0] sm:$0xff]
  %v32 = vld [vmem:[%s1 + $0xa8] sm:$0xff]
  %v33 = vld [vmem:[%s1 + $0xb0] sm:$0xff]
  %v34 = vld [vmem:[%s1 + $0xb8] sm:$0xff]
  %v35 = vld [vmem:[%s1 + $0xc0] sm:$0xff]
  %v36 = vld [vmem:[%s1 + $0xc8] sm:$0xff]
  %v37 = vld [vmem:[%s1 + $0xd0] sm:$0xff]
  %v38 = vld [vmem:[%s1 + $0xd8] sm:$0xff]
  %v39 = vld [vmem:[%s1 + $0xe0] sm:$0xff]
  %v40 = vld [vmem:[%s1 + $0xe8] sm:$0xff]
  %v41 = vld [vmem:[%s1 + $0xf0] sm:$0xff]
  %v42 = vld [vmem:[%s1 + $0xf8] sm:$0xff]
  %vm43 = vcmp.lt.f32.partialorder %v11, 0.0052244896
  %vm44 = vcmp.lt.f32.partialorder %v12, 0.0052244896
  %vm45 = vcmp.lt.f32.partialorder %v13, 0.0052244896
  %vm46 = vcmp.lt.f32.partialorder %v14, 0.0052244896
  %vm47 = vcmp.lt.f32.partialorder %v15, 0.0052244896
  %vm48 = vcmp.lt.f32.partialorder %v16, 0.0052244896
  %vm49 = vcmp.lt.f32.partialorder %v17, 0.0052244896
  %vm50 = vcmp.lt.f32.partialorder %v18, 0.0052244896
  %vm51 = vcmp.lt.f32.partialorder %v19, 0.0052244896
  %vm52 = vcmp.lt.f32.partialorder %v20, 0.0052244896
  %vm53 = vcmp.lt.f32.partialorder %v21, 0.0052244896
  %vm54 = vcmp.lt.f32.partialorder %v22, 0.0052244896
  %vm55 = vcmp.lt.f32.partialorder %v23, 0.0052244896
  %vm56 = vcmp.lt.f32.partialorder %v24, 0.0052244896
  %vm57 = vcmp.lt.f32.partialorder %v25, 0.0052244896
  %vm58 = vcmp.lt.f32.partialorder %v26, 0.0052244896
  %vm59 = vcmp.lt.f32.partialorder %v27, 0.0052244896
  %vm60 = vcmp.lt.f32.partialorder %v28, 0.0052244896
  %vm61 = vcmp.lt.f32.partialorder %v29, 0.0052244896
  %vm62 = vcmp.lt.f32.partialorder %v30, 0.0052244896
  %vm63 = vcmp.lt.f32.partialorder %v31, 0.0052244896
  %vm64 = vcmp.lt.f32.partialorder %v32, 0.0052244896
  %vm65 = vcmp.lt.f32.partialorder %v33, 0.0052244896
  %vm66 = vcmp.lt.f32.partialorder %v34, 0.0052244896
  %vm67 = vcmp.lt.f32.partialorder %v35, 0.0052244896
  %vm68 = vcmp.lt.f32.partialorder %v36, 0.0052244896
  %vm69 = vcmp.lt.f32.partialorder %v37, 0.0052244896
  %vm70 = vcmp.lt.f32.partialorder %v38, 0.0052244896
  %vm71 = vcmp.lt.f32.partialorder %v39, 0.0052244896
  %vm72 = vcmp.lt.f32.partialorder %v40, 0.0052244896
  %vm73 = vcmp.lt.f32.partialorder %v41, 0.0052244896
  %vm74 = vcmp.lt.f32.partialorder %v42, 0.0052244896
  %v75 = vsel %vm43, 1, 0
  %v76 = vsel %vm44, 1, 0
  %v77 = vsel %vm45, 1, 0
  %v78 = vsel %vm46, 1, 0
  %v79 = vsel %vm47, 1, 0
  %v80 = vsel %vm48, 1, 0
  %v81 = vsel %vm49, 1, 0
  %v82 = vsel %vm50, 1, 0
  %v83 = vsel %vm51, 1, 0
  %v84 = vsel %vm52, 1, 0
  %v85 = vsel %vm53, 1, 0
  %v86 = vsel %vm54, 1, 0
  %v87 = vsel %vm55, 1, 0
  %v88 = vsel %vm56, 1, 0
  %v89 = vsel %vm57, 1, 0
  %v90 = vsel %vm58, 1, 0
  %v91 = vsel %vm59, 1, 0
  %v92 = vsel %vm60, 1, 0
  %v93 = vsel %vm61, 1, 0
  %v94 = vsel %vm62, 1, 0
  %v95 = vsel %vm63, 1, 0
  %v96 = vsel %vm64, 1, 0
  %v97 = vsel %vm65, 1, 0
  %v98 = vsel %vm66, 1, 0
  %v99 = vsel %vm67, 1, 0
  %v100 = vsel %vm68, 1, 0
  %v101 = vsel %vm69, 1, 0
  %v102 = vsel %vm70, 1, 0
  %v103 = vsel %vm71, 1, 0
  %v104 = vsel %vm72, 1, 0
  %v105 = vsel %vm73, 1, 0
  %v106 = vsel %vm74, 1, 0
  %v107 = vcvt.s32.f32 %v75
  %v108 = vcvt.s32.f32 %v76
  %v109 = vcvt.s32.f32 %v77
  %v110 = vcvt.s32.f32 %v78
  %v111 = vcvt.s32.f32 %v79
  %v112 = vcvt.s32.f32 %v80
  %v113 = vcvt.s32.f32 %v81
  %v114 = vcvt.s32.f32 %v82
  %v115 = vcvt.s32.f32 %v83
  %v116 = vcvt.s32.f32 %v84
  %v117 = vcvt.s32.f32 %v85
  %v118 = vcvt.s32.f32 %v86
  %v119 = vcvt.s32.f32 %v87
  %v120 = vcvt.s32.f32 %v88
  %v121 = vcvt.s32.f32 %v89
  %v122 = vcvt.s32.f32 %v90
  %v123 = vcvt.s32.f32 %v91
  %v124 = vcvt.s32.f32 %v92
  %v125 = vcvt.s32.f32 %v93
  %v126 = vcvt.s32.f32 %v94
  %v127 = vcvt.s32.f32 %v95
  %v128 = vcvt.s32.f32 %v96
  %v129 = vcvt.s32.f32 %v97
  %v130 = vcvt.s32.f32 %v98
  %v131 = vcvt.s32.f32 %v99
  %v132 = vcvt.s32.f32 %v100
  %v133 = vcvt.s32.f32 %v101
  %v134 = vcvt.s32.f32 %v102
  %v135 = vcvt.s32.f32 %v103
  %v136 = vcvt.s32.f32 %v104
  %v137 = vcvt.s32.f32 %v105
  %v138 = vcvt.s32.f32 %v106
  %139 = vst [vmem:[#allocation2] sm:$0xff] 0.0
  %140 = vst [vmem:[#allocation2 + $0x8] sm:$0xff] 0.0
  %141 = vst [vmem:[#allocation2 + $0x10] sm:$0x3f] 0.0
  %142 = vst [vmem:[#allocation2 + $0x18] sm:$0xff] 0.0
  %143 = vst [vmem:[#allocation2 + $0x20] sm:$0xff] 0.0
  %144 = vst [vmem:[#allocation2 + $0x28] sm:$0x3f] 0.0
  %145 = vst [vmem:[#allocation2 + $0x30] sm:$0xff] 0.0
  %146 = vst [vmem:[#allocation2 + $0x38] sm:$0xff] 0.0
  %147 = vst [vmem:[#allocation2 + $0x40] sm:$0x3f] 0.0
  %148 = vst [vmem:[#allocation2 + $0x48] sm:$0xff] 0.0
  %149 = vst [vmem:[#allocation2 + $0x50] sm:$0xff] 0.0
  %150 = vst [vmem:[#allocation2 + $0x58] sm:$0x3f] 0.0
  %151 = vst [vmem:[#allocation2 + $0x60] sm:$0xff] 0.0
  %152 = vst [vmem:[#allocation2 + $0x68] sm:$0xff] 0.0
  %153 = vst [vmem:[#allocation2 + $0x70] sm:$0x3f] 0.0
  %154 = vst [vmem:[#allocation2 + $0x78] sm:$0xff] 0.0
  %155 = vst [vmem:[#allocation2 + $0x80] sm:$0xff] 0.0
  %156 = vst [vmem:[#allocation2 + $0x88] sm:$0x3f] 0.0
  %157 = vst [vmem:[#allocation2 + $0x90] sm:$0xff] 0.0
  %158 = vst [vmem:[#allocation2 + $0x98] sm:$0xff] 0.0
  %159 = vst [vmem:[#allocation2 + $0xa0] sm:$0x3f] 0.0
  %160 = vst [vmem:[#allocation2 + $0xa8] sm:$0xff] 0.0
  %161 = vst [vmem:[#allocation2 + $0xb0] sm:$0xff] 0.0
  %162 = vst [vmem:[#allocation2 + $0xb8] sm:$0x3f] 0.0
  %163 = vst [vmem:[#allocation2 + $0xc0] sm:$0xff] 0.0
  %164 = vst [vmem:[#allocation2 + $0xc8] sm:$0xff] 0.0
  %165 = vst [vmem:[#allocation2 + $0xd0] sm:$0x3f] 0.0
  %166 = vst [vmem:[#allocation2 + $0xd8] sm:$0xff] 0.0
  %167 = vst [vmem:[#allocation2 + $0xe0] sm:$0xff] 0.0
  %168 = vst [vmem:[#allocation2 + $0xe8] sm:$0x3f] 0.0
  %169 = vst [vmem:[#allocation2 + $0xf0] sm:$0xff] 0.0
  %170 = vst [vmem:[#allocation2 + $0xf8] sm:$0xff] 0.0
  %171 = vst [vmem:[#allocation2 + $0x100] sm:$0x3f] 0.0
  %172 = vst [vmem:[#allocation2 + $0x108] sm:$0xff] 0.0
  %173 = vst [vmem:[#allocation2 + $0x110] sm:$0xff] 0.0
  %174 = vst [vmem:[#allocation2 + $0x118] sm:$0x3f] 0.0
  %175 = vst [vmem:[#allocation2 + $0x120] sm:$0xff] 0.0
  %176 = vst [vmem:[#allocation2 + $0x128] sm:$0xff] 0.0
  %177 = vst [vmem:[#allocation2 + $0x130] sm:$0x3f] 0.0
  %178 = vst [vmem:[#allocation2 + $0x138] sm:$0xff] 0.0
  %179 = vst [vmem:[#allocation2 + $0x140] sm:$0xff] 0.0
  %180 = vst [vmem:[#allocation2 + $0x148] sm:$0x3f] 0.0
  %181 = vst [vmem:[#allocation2 + $0x150] sm:$0xff] 0.0
  %182 = vst [vmem:[#allocation2 + $0x158] sm:$0xff] 0.0
  %183 = vst [vmem:[#allocation2 + $0x160] sm:$0x3f] 0.0
  %184 = vst [vmem:[#allocation2 + $0x168] sm:$0xff] 0.0
  %185 = vst [vmem:[#allocation2 + $0x170] sm:$0xff] 0.0
  %186 = vst [vmem:[#allocation2 + $0x178] sm:$0x3f] 0.0
  %187 = vst [vmem:[#allocation2 + $0x3] sm:$0xff] %v107
  %188 = vst [vmem:[#allocation2 + $0xb] sm:$0xff] %v108
  %189 = vst [vmem:[#allocation2 + $0x1b] sm:$0xff] %v109
  %190 = vst [vmem:[#allocation2 + $0x23] sm:$0xff] %v110
  %191 = vst [vmem:[#allocation2 + $0x33] sm:$0xff] %v111
  %192 = vst [vmem:[#allocation2 + $0x3b] sm:$0xff] %v112
  %193 = vst [vmem:[#allocation2 + $0x4b] sm:$0xff] %v113
  %194 = vst [vmem:[#allocation2 + $0x53] sm:$0xff] %v114
  %195 = vst [vmem:[#allocation2 + $0x63] sm:$0xff] %v115
  %196 = vst [vmem:[#allocation2 + $0x6b] sm:$0xff] %v116
  %197 = vst [vmem:[#allocation2 + $0x7b] sm:$0xff] %v117
  %198 = vst [vmem:[#allocation2 + $0x83] sm:$0xff] %v118
  %199 = vst [vmem:[#allocation2 + $0x93] sm:$0xff] %v119
  %200 = vst [vmem:[#allocation2 + $0x9b] sm:$0xff] %v120
  %201 = vst [vmem:[#allocation2 + $0xab] sm:$0xff] %v121
  %202 = vst [vmem:[#allocation2 + $0xb3] sm:$0xff] %v122
  %203 = vst [vmem:[#allocation2 + $0xc3] sm:$0xff] %v123
  %204 = vst [vmem:[#allocation2 + $0xcb] sm:$0xff] %v124
  %205 = vst [vmem:[#allocation2 + $0xdb] sm:$0xff] %v125
  %206 = vst [vmem:[#allocation2 + $0xe3] sm:$0xff] %v126
  %207 = vst [vmem:[#allocation2 + $0xf3] sm:$0xff] %v127
  %208 = vst [vmem:[#allocation2 + $0xfb] sm:$0xff] %v128
  %209 = vst [vmem:[#allocation2 + $0x10b] sm:$0xff] %v129
  %210 = vst [vmem:[#allocation2 + $0x113] sm:$0xff] %v130
  %211 = vst [vmem:[#allocation2 + $0x123] sm:$0xff] %v131
  %212 = vst [vmem:[#allocation2 + $0x12b] sm:$0xff] %v132
  %213 = vst [vmem:[#allocation2 + $0x13b] sm:$0xff] %v133
  %214 = vst [vmem:[#allocation2 + $0x143] sm:$0xff] %v134
  %215 = vst [vmem:[#allocation2 + $0x153] sm:$0xff] %v135
  %216 = vst [vmem:[#allocation2 + $0x15b] sm:$0xff] %v136
  %217 = vst [vmem:[#allocation2 + $0x16b] sm:$0xff] %v137
  %218 = vst [vmem:[#allocation2 + $0x173] sm:$0xff] %v138
  %v219 = vld [vmem:[#allocation2] sm:$0xff]
  %v220 = vld [vmem:[#allocation2 + $0x8] sm:$0xff]
  %v221 = vld [vmem:[#allocation2 + $0x18] sm:$0xff]
  %v222 = vld [vmem:[#allocation2 + $0x20] sm:$0xff]
  %v223 = vld [vmem:[#allocation2 + $0x30] sm:$0xff]
  %v224 = vld [vmem:[#allocation2 + $0x38] sm:$0xff]
  %v225 = vld [vmem:[#allocation2 + $0x48] sm:$0xff]
  %v226 = vld [vmem:[#allocation2 + $0x50] sm:$0xff]
  %v227 = vld [vmem:[#allocation2 + $0x60] sm:$0xff]
  %v228 = vld [vmem:[#allocation2 + $0x68] sm:$0xff]
  %v229 = vld [vmem:[#allocation2 + $0x78] sm:$0xff]
  %v230 = vld [vmem:[#allocation2 + $0x80] sm:$0xff]
  %v231 = vld [vmem:[#allocation2 + $0x90] sm:$0xff]
  %v232 = vld [vmem:[#allocation2 + $0x98] sm:$0xff]
  %v233 = vld [vmem:[#allocation2 + $0xa8] sm:$0xff]
  %v234 = vld [vmem:[#allocation2 + $0xb0] sm:$0xff]
  %v235 = vld [vmem:[#allocation2 + $0xc0] sm:$0xff]
  %v236 = vld [vmem:[#allocation2 + $0xc8] sm:$0xff]
  %v237 = vld [vmem:[#allocation2 + $0xd8] sm:$0xff]
  %v238 = vld [vmem:[#allocation2 + $0xe0] sm:$0xff]
  %v239 = vld [vmem:[#allocation2 + $0xf0] sm:$0xff]
  %v240 = vld [vmem:[#allocation2 + $0xf8] sm:$0xff]
  %v241 = vld [vmem:[#allocation2 + $0x108] sm:$0xff]
  %v242 = vld [vmem:[#allocation2 + $0x110] sm:$0xff]
  %v243 = vld [vmem:[#allocation2 + $0x120] sm:$0xff]
  %v244 = vld [vmem:[#allocation2 + $0x128] sm:$0xff]
  %v245 = vld [vmem:[#allocation2 + $0x138] sm:$0xff]
  %v246 = vld [vmem:[#allocation2 + $0x140] sm:$0xff]
  %v247 = vld [vmem:[#allocation2 + $0x150] sm:$0xff]
  %v248 = vld [vmem:[#allocation2 + $0x158] sm:$0xff]
  %v249 = vld [vmem:[#allocation2 + $0x168] sm:$0xff]
  %v250 = vld [vmem:[#allocation2 + $0x170] sm:$0xff]
  %v251 = vmax.f32 %v107, %v219
  %v252 = vmax.f32 %v108, %v220
  %v253 = vmax.f32 %v109, %v221
  %v254 = vmax.f32 %v110, %v222
  %v255 = vmax.f32 %v111, %v223
  %v256 = vmax.f32 %v112, %v224
  %v257 = vmax.f32 %v113, %v225
  %v258 = vmax.f32 %v114, %v226
  %v259 = vmax.f32 %v115, %v227
  %v260 = vmax.f32 %v116, %v228
  %v261 = vmax.f32 %v117, %v229
  %v262 = vmax.f32 %v118, %v230
  %v263 = vmax.f32 %v119, %v231
  %v264 = vmax.f32 %v120, %v232
  %v265 = vmax.f32 %v121, %v233
  %v266 = vmax.f32 %v122, %v234
  %v267 = vmax.f32 %v123, %v235
  %v268 = vmax.f32 %v124, %v236
  %v269 = vmax.f32 %v125, %v237
  %v270 = vmax.f32 %v126, %v238
  %v271 = vmax.f32 %v127, %v239
  %v272 = vmax.f32 %v128, %v240
  %v273 = vmax.f32 %v129, %v241
  %v274 = vmax.f32 %v130, %v242
  %v275 = vmax.f32 %v131, %v243
  %v276 = vmax.f32 %v132, %v244
  %v277 = vmax.f32 %v133, %v245
  %v278 = vmax.f32 %v134, %v246
  %v279 = vmax.f32 %v135, %v247
  %v280 = vmax.f32 %v136, %v248
  %v281 = vmax.f32 %v137, %v249
  %v282 = vmax.f32 %v138, %v250
  %v283 = vld [vmem:[#allocation2 + $0x1] sm:$0xff]
  %v284 = vld [vmem:[#allocation2 + $0x9] sm:$0xff]
  %v285 = vld [vmem:[#allocation2 + $0x19] sm:$0xff]
  %v286 = vld [vmem:[#allocation2 + $0x21] sm:$0xff]
  %v287 = vld [vmem:[#allocation2 + $0x31] sm:$0xff]
  %v288 = vld [vmem:[#allocation2 + $0x39] sm:$0xff]
  %v289 = vld [vmem:[#allocation2 + $0x49] sm:$0xff]
  %v290 = vld [vmem:[#allocation2 + $0x51] sm:$0xff]
  %v291 = vld [vmem:[#allocation2 + $0x61] sm:$0xff]
  %v292 = vld [vmem:[#allocation2 + $0x69] sm:$0xff]
  %v293 = vld [vmem:[#allocation2 + $0x79] sm:$0xff]
  %v294 = vld [vmem:[#allocation2 + $0x81] sm:$0xff]
  %v295 = vld [vmem:[#allocation2 + $0x91] sm:$0xff]
  %v296 = vld [vmem:[#allocation2 + $0x99] sm:$0xff]
  %v297 = vld [vmem:[#allocation2 + $0xa9] sm:$0xff]
  %v298 = vld [vmem:[#allocation2 + $0xb1] sm:$0xff]
  %v299 = vld [vmem:[#allocation2 + $0xc1] sm:$0xff]
  %v300 = vld [vmem:[#allocation2 + $0xc9] sm:$0xff]
  %v301 = vld [vmem:[#allocation2 + $0xd9] sm:$0xff]
  %v302 = vld [vmem:[#allocation2 + $0xe1] sm:$0xff]
  %v303 = vld [vmem:[#allocation2 + $0xf1] sm:$0xff]
  %v304 = vld [vmem:[#allocation2 + $0xf9] sm:$0xff]
  %v305 = vld [vmem:[#allocation2 + $0x109] sm:$0xff]
  %v306 = vld [vmem:[#allocation2 + $0x111] sm:$0xff]
  %v307 = vld [vmem:[#allocation2 + $0x121] sm:$0xff]
  %v308 = vld [vmem:[#allocation2 + $0x129] sm:$0xff]
  %v309 = vld [vmem:[#allocation2 + $0x139] sm:$0xff]
  %v310 = vld [vmem:[#allocation2 + $0x141] sm:$0xff]
  %v311 = vld [vmem:[#allocation2 + $0x151] sm:$0xff]
  %v312 = vld [vmem:[#allocation2 + $0x159] sm:$0xff]
  %v313 = vld [vmem:[#allocation2 + $0x169] sm:$0xff]
  %v314 = vld [vmem:[#allocation2 + $0x171] sm:$0xff]
  %v315 = vmax.f32 %v251, %v283
  %v316 = vmax.f32 %v252, %v284
  %v317 = vmax.f32 %v253, %v285
  %v318 = vmax.f32 %v254, %v286
  %v319 = vmax.f32 %v255, %v287
  %v320 = vmax.f32 %v256, %v288
  %v321 = vmax.f32 %v257, %v289
  %v322 = vmax.f32 %v258, %v290
  %v323 = vmax.f32 %v259, %v291
  %v324 = vmax.f32 %v260, %v292
  %v325 = vmax.f32 %v261, %v293
  %v326 = vmax.f32 %v262, %v294
  %v327 = vmax.f32 %v263, %v295
  %v328 = vmax.f32 %v264, %v296
  %v329 = vmax.f32 %v265, %v297
  %v330 = vmax.f32 %v266, %v298
  %v331 = vmax.f32 %v267, %v299
  %v332 = vmax.f32 %v268, %v300
  %v333 = vmax.f32 %v269, %v301
  %v334 = vmax.f32 %v270, %v302
  %v335 = vmax.f32 %v271, %v303
  %v336 = vmax.f32 %v272, %v304
  %v337 = vmax.f32 %v273, %v305
  %v338 = vmax.f32 %v274, %v306
  %v339 = vmax.f32 %v275, %v307
  %v340 = vmax.f32 %v276, %v308
  %v341 = vmax.f32 %v277, %v309
  %v342 = vmax.f32 %v278, %v310
  %v343 = vmax.f32 %v279, %v311
  %v344 = vmax.f32 %v280, %v312
  %v345 = vmax.f32 %v281, %v313
  %v346 = vmax.f32 %v282, %v314
  %v347 = vld [vmem:[#allocation2 + $0x2] sm:$0xff]
  %v348 = vld [vmem:[#allocation2 + $0xa] sm:$0xff]
  %v349 = vld [vmem:[#allocation2 + $0x1a] sm:$0xff]
  %v350 = vld [vmem:[#allocation2 + $0x22] sm:$0xff]
  %v351 = vld [vmem:[#allocation2 + $0x32] sm:$0xff]
  %v352 = vld [vmem:[#allocation2 + $0x3a] sm:$0xff]
  %v353 = vld [vmem:[#allocation2 + $0x4a] sm:$0xff]
  %v354 = vld [vmem:[#allocation2 + $0x52] sm:$0xff]
  %v355 = vld [vmem:[#allocation2 + $0x62] sm:$0xff]
  %v356 = vld [vmem:[#allocation2 + $0x6a] sm:$0xff]
  %v357 = vld [vmem:[#allocation2 + $0x7a] sm:$0xff]
  %v358 = vld [vmem:[#allocation2 + $0x82] sm:$0xff]
  %v359 = vld [vmem:[#allocation2 + $0x92] sm:$0xff]
  %v360 = vld [vmem:[#allocation2 + $0x9a] sm:$0xff]
  %v361 = vld [vmem:[#allocation2 + $0xaa] sm:$0xff]
  %v362 = vld [vmem:[#allocation2 + $0xb2] sm:$0xff]
  %v363 = vld [vmem:[#allocation2 + $0xc2] sm:$0xff]
  %v364 = vld [vmem:[#allocation2 + $0xca] sm:$0xff]
  %v365 = vld [vmem:[#allocation2 + $0xda] sm:$0xff]
  %v366 = vld [vmem:[#allocation2 + $0xe2] sm:$0xff]
  %v367 = vld [vmem:[#allocation2 + $0xf2] sm:$0xff]
  %v368 = vld [vmem:[#allocation2 + $0xfa] sm:$0xff]
  %v369 = vld [vmem:[#allocation2 + $0x10a] sm:$0xff]
  %v370 = vld [vmem:[#allocation2 + $0x112] sm:$0xff]
  %v371 = vld [vmem:[#allocation2 + $0x122] sm:$0xff]
  %v372 = vld [vmem:[#allocation2 + $0x12a] sm:$0xff]
  %v373 = vld [vmem:[#allocation2 + $0x13a] sm:$0xff]
  %v374 = vld [vmem:[#allocation2 + $0x142] sm:$0xff]
  %v375 = vld [vmem:[#allocation2 + $0x152] sm:$0xff]
  %v376 = vld [vmem:[#allocation2 + $0x15a] sm:$0xff]
  %v377 = vld [vmem:[#allocation2 + $0x16a] sm:$0xff]
  %v378 = vld [vmem:[#allocation2 + $0x172] sm:$0xff]
  %v379 = vmax.f32 %v315, %v347
  %v380 = vmax.f32 %v316, %v348
  %v381 = vmax.f32 %v317, %v349
  %v382 = vmax.f32 %v318, %v350
  %v383 = vmax.f32 %v319, %v351
  %v384 = vmax.f32 %v320, %v352
  %v385 = vmax.f32 %v321, %v353
  %v386 = vmax.f32 %v322, %v354
  %v387 = vmax.f32 %v323, %v355
  %v388 = vmax.f32 %v324, %v356
  %v389 = vmax.f32 %v325, %v357
  %v390 = vmax.f32 %v326, %v358
  %v391 = vmax.f32 %v327, %v359
  %v392 = vmax.f32 %v328, %v360
  %v393 = vmax.f32 %v329, %v361
  %v394 = vmax.f32 %v330, %v362
  %v395 = vmax.f32 %v331, %v363
  %v396 = vmax.f32 %v332, %v364
  %v397 = vmax.f32 %v333, %v365
  %v398 = vmax.f32 %v334, %v366
  %v399 = vmax.f32 %v335, %v367
  %v400 = vmax.f32 %v336, %v368
  %v401 = vmax.f32 %v337, %v369
  %v402 = vmax.f32 %v338, %v370
  %v403 = vmax.f32 %v339, %v371
  %v404 = vmax.f32 %v340, %v372
  %v405 = vmax.f32 %v341, %v373
  %v406 = vmax.f32 %v342, %v374
  %v407 = vmax.f32 %v343, %v375
  %v408 = vmax.f32 %v344, %v376
  %v409 = vmax.f32 %v345, %v377
  %v410 = vmax.f32 %v346, %v378
  %v411 = vld [vmem:[#allocation2 + $0x4] sm:$0xff]
  %v412 = vld [vmem:[#allocation2 + $0xc] sm:$0xff]
  %v413 = vld [vmem:[#allocation2 + $0x1c] sm:$0xff]
  %v414 = vld [vmem:[#allocation2 + $0x24] sm:$0xff]
  %v415 = vld [vmem:[#allocation2 + $0x34] sm:$0xff]
  %v416 = vld [vmem:[#allocation2 + $0x3c] sm:$0xff]
  %v417 = vld [vmem:[#allocation2 + $0x4c] sm:$0xff]
  %v418 = vld [vmem:[#allocation2 + $0x54] sm:$0xff]
  %v419 = vld [vmem:[#allocation2 + $0x64] sm:$0xff]
  %v420 = vld [vmem:[#allocation2 + $0x6c] sm:$0xff]
  %v421 = vld [vmem:[#allocation2 + $0x7c] sm:$0xff]
  %v422 = vld [vmem:[#allocation2 + $0x84] sm:$0xff]
  %v423 = vld [vmem:[#allocation2 + $0x94] sm:$0xff]
  %v424 = vld [vmem:[#allocation2 + $0x9c] sm:$0xff]
  %v425 = vld [vmem:[#allocation2 + $0xac] sm:$0xff]
  %v426 = vld [vmem:[#allocation2 + $0xb4] sm:$0xff]
  %v427 = vld [vmem:[#allocation2 + $0xc4] sm:$0xff]
  %v428 = vld [vmem:[#allocation2 + $0xcc] sm:$0xff]
  %v429 = vld [vmem:[#allocation2 + $0xdc] sm:$0xff]
  %v430 = vld [vmem:[#allocation2 + $0xe4] sm:$0xff]
  %v431 = vld [vmem:[#allocation2 + $0xf4] sm:$0xff]
  %v432 = vld [vmem:[#allocation2 + $0xfc] sm:$0xff]
  %v433 = vld [vmem:[#allocation2 + $0x10c] sm:$0xff]
  %v434 = vld [vmem:[#allocation2 + $0x114] sm:$0xff]
  %v435 = vld [vmem:[#allocation2 + $0x124] sm:$0xff]
  %v436 = vld [vmem:[#allocation2 + $0x12c] sm:$0xff]
  %v437 = vld [vmem:[#allocation2 + $0x13c] sm:$0xff]
  %v438 = vld [vmem:[#allocation2 + $0x144] sm:$0xff]
  %v439 = vld [vmem:[#allocation2 + $0x154] sm:$0xff]
  %v440 = vld [vmem:[#allocation2 + $0x15c] sm:$0xff]
  %v441 = vld [vmem:[#allocation2 + $0x16c] sm:$0xff]
  %v442 = vld [vmem:[#allocation2 + $0x174] sm:$0xff]
  %v443 = vmax.f32 %v379, %v411
  %v444 = vmax.f32 %v380, %v412
  %v445 = vmax.f32 %v381, %v413
  %v446 = vmax.f32 %v382, %v414
  %v447 = vmax.f32 %v383, %v415
  %v448 = vmax.f32 %v384, %v416
  %v449 = vmax.f32 %v385, %v417
  %v450 = vmax.f32 %v386, %v418
  %v451 = vmax.f32 %v387, %v419
  %v452 = vmax.f32 %v388, %v420
  %v453 = vmax.f32 %v389, %v421
  %v454 = vmax.f32 %v390, %v422
  %v455 = vmax.f32 %v391, %v423
  %v456 = vmax.f32 %v392, %v424
  %v457 = vmax.f32 %v393, %v425
  %v458 = vmax.f32 %v394, %v426
  %v459 = vmax.f32 %v395, %v427
  %v460 = vmax.f32 %v396, %v428
  %v461 = vmax.f32 %v397, %v429
  %v462 = vmax.f32 %v398, %v430
  %v463 = vmax.f32 %v399, %v431
  %v464 = vmax.f32 %v400, %v432
  %v465 = vmax.f32 %v401, %v433
  %v466 = vmax.f32 %v402, %v434
  %v467 = vmax.f32 %v403, %v435
  %v468 = vmax.f32 %v404, %v436
  %v469 = vmax.f32 %v405, %v437
  %v470 = vmax.f32 %v406, %v438
  %v471 = vmax.f32 %v407, %v439
  %v472 = vmax.f32 %v408, %v440
  %v473 = vmax.f32 %v409, %v441
  %v474 = vmax.f32 %v410, %v442
  %v475 = vld [vmem:[#allocation2 + $0x5] sm:$0xff]
  %v476 = vld [vmem:[#allocation2 + $0xd] sm:$0xff]
  %v477 = vld [vmem:[#allocation2 + $0x1d] sm:$0xff]
  %v478 = vld [vmem:[#allocation2 + $0x25] sm:$0xff]
  %v479 = vld [vmem:[#allocation2 + $0x35] sm:$0xff]
  %v480 = vld [vmem:[#allocation2 + $0x3d] sm:$0xff]
  %v481 = vld [vmem:[#allocation2 + $0x4d] sm:$0xff]
  %v482 = vld [vmem:[#allocation2 + $0x55] sm:$0xff]
  %v483 = vld [vmem:[#allocation2 + $0x65] sm:$0xff]
  %v484 = vld [vmem:[#allocation2 + $0x6d] sm:$0xff]
  %v485 = vld [vmem:[#allocation2 + $0x7d] sm:$0xff]
  %v486 = vld [vmem:[#allocation2 + $0x85] sm:$0xff]
  %v487 = vld [vmem:[#allocation2 + $0x95] sm:$0xff]
  %v488 = vld [vmem:[#allocation2 + $0x9d] sm:$0xff]
  %v489 = vld [vmem:[#allocation2 + $0xad] sm:$0xff]
  %v490 = vld [vmem:[#allocation2 + $0xb5] sm:$0xff]
  %v491 = vld [vmem:[#allocation2 + $0xc5] sm:$0xff]
  %v492 = vld [vmem:[#allocation2 + $0xcd] sm:$0xff]
  %v493 = vld [vmem:[#allocation2 + $0xdd] sm:$0xff]
  %v494 = vld [vmem:[#allocation2 + $0xe5] sm:$0xff]
  %v495 = vld [vmem:[#allocation2 + $0xf5] sm:$0xff]
  %v496 = vld [vmem:[#allocation2 + $0xfd] sm:$0xff]
  %v497 = vld [vmem:[#allocation2 + $0x10d] sm:$0xff]
  %v498 = vld [vmem:[#allocation2 + $0x115] sm:$0xff]
  %v499 = vld [vmem:[#allocation2 + $0x125] sm:$0xff]
  %v500 = vld [vmem:[#allocation2 + $0x12d] sm:$0xff]
  %v501 = vld [vmem:[#allocation2 + $0x13d] sm:$0xff]
  %v502 = vld [vmem:[#allocation2 + $0x145] sm:$0xff]
  %v503 = vld [vmem:[#allocation2 + $0x155] sm:$0xff]
  %v504 = vld [vmem:[#allocation2 + $0x15d] sm:$0xff]
  %v505 = vld [vmem:[#allocation2 + $0x16d] sm:$0xff]
  %v506 = vld [vmem:[#allocation2 + $0x175] sm:$0xff]
  %v507 = vmax.f32 %v443, %v475
  %v508 = vmax.f32 %v444, %v476
  %v509 = vmax.f32 %v445, %v477
  %v510 = vmax.f32 %v446, %v478
  %v511 = vmax.f32 %v447, %v479
  %v512 = vmax.f32 %v448, %v480
  %v513 = vmax.f32 %v449, %v481
  %v514 = vmax.f32 %v450, %v482
  %v515 = vmax.f32 %v451, %v483
  %v516 = vmax.f32 %v452, %v484
  %v517 = vmax.f32 %v453, %v485
  %v518 = vmax.f32 %v454, %v486
  %v519 = vmax.f32 %v455, %v487
  %v520 = vmax.f32 %v456, %v488
  %v521 = vmax.f32 %v457, %v489
  %v522 = vmax.f32 %v458, %v490
  %v523 = vmax.f32 %v459, %v491
  %v524 = vmax.f32 %v460, %v492
  %v525 = vmax.f32 %v461, %v493
  %v526 = vmax.f32 %v462, %v494
  %v527 = vmax.f32 %v463, %v495
  %v528 = vmax.f32 %v464, %v496
  %v529 = vmax.f32 %v465, %v497
  %v530 = vmax.f32 %v466, %v498
  %v531 = vmax.f32 %v467, %v499
  %v532 = vmax.f32 %v468, %v500
  %v533 = vmax.f32 %v469, %v501
  %v534 = vmax.f32 %v470, %v502
  %v535 = vmax.f32 %v471, %v503
  %v536 = vmax.f32 %v472, %v504
  %v537 = vmax.f32 %v473, %v505
  %v538 = vmax.f32 %v474, %v506
  %v539 = vld [vmem:[#allocation2 + $0x6] sm:$0xff]
  %v540 = vld [vmem:[#allocation2 + $0xe] sm:$0xff]
  %v541 = vld [vmem:[#allocation2 + $0x1e] sm:$0xff]
  %v542 = vld [vmem:[#allocation2 + $0x26] sm:$0xff]
  %v543 = vld [vmem:[#allocation2 + $0x36] sm:$0xff]
  %v544 = vld [vmem:[#allocation2 + $0x3e] sm:$0xff]
  %v545 = vld [vmem:[#allocation2 + $0x4e] sm:$0xff]
  %v546 = vld [vmem:[#allocation2 + $0x56] sm:$0xff]
  %v547 = vld [vmem:[#allocation2 + $0x66] sm:$0xff]
  %v548 = vld [vmem:[#allocation2 + $0x6e] sm:$0xff]
  %v549 = vld [vmem:[#allocation2 + $0x7e] sm:$0xff]
  %v550 = vld [vmem:[#allocation2 + $0x86] sm:$0xff]
  %v551 = vld [vmem:[#allocation2 + $0x96] sm:$0xff]
  %v552 = vld [vmem:[#allocation2 + $0x9e] sm:$0xff]
  %v553 = vld [vmem:[#allocation2 + $0xae] sm:$0xff]
  %v554 = vld [vmem:[#allocation2 + $0xb6] sm:$0xff]
  %v555 = vld [vmem:[#allocation2 + $0xc6] sm:$0xff]
  %v556 = vld [vmem:[#allocation2 + $0xce] sm:$0xff]
  %v557 = vld [vmem:[#allocation2 + $0xde] sm:$0xff]
  %v558 = vld [vmem:[#allocation2 + $0xe6] sm:$0xff]
  %v559 = vld [vmem:[#allocation2 + $0xf6] sm:$0xff]
  %v560 = vld [vmem:[#allocation2 + $0xfe] sm:$0xff]
  %v561 = vld [vmem:[#allocation2 + $0x10e] sm:$0xff]
  %v562 = vld [vmem:[#allocation2 + $0x116] sm:$0xff]
  %v563 = vld [vmem:[#allocation2 + $0x126] sm:$0xff]
  %v564 = vld [vmem:[#allocation2 + $0x12e] sm:$0xff]
  %v565 = vld [vmem:[#allocation2 + $0x13e] sm:$0xff]
  %v566 = vld [vmem:[#allocation2 + $0x146] sm:$0xff]
  %v567 = vld [vmem:[#allocation2 + $0x156] sm:$0xff]
  %v568 = vld [vmem:[#allocation2 + $0x15e] sm:$0xff]
  %v569 = vld [vmem:[#allocation2 + $0x16e] sm:$0xff]
  %v570 = vld [vmem:[#allocation2 + $0x176] sm:$0xff]
  %v571 = vmax.f32 %v507, %v539
  %v572 = vmax.f32 %v508, %v540
  %v573 = vmax.f32 %v509, %v541
  %v574 = vmax.f32 %v510, %v542
  %v575 = vmax.f32 %v511, %v543
  %v576 = vmax.f32 %v512, %v544
  %v577 = vmax.f32 %v513, %v545
  %v578 = vmax.f32 %v514, %v546
  %v579 = vmax.f32 %v515, %v547
  %v580 = vmax.f32 %v516, %v548
  %v581 = vmax.f32 %v517, %v549
  %v582 = vmax.f32 %v518, %v550
  %v583 = vmax.f32 %v519, %v551
  %v584 = vmax.f32 %v520, %v552
  %v585 = vmax.f32 %v521, %v553
  %v586 = vmax.f32 %v522, %v554
  %v587 = vmax.f32 %v523, %v555
  %v588 = vmax.f32 %v524, %v556
  %v589 = vmax.f32 %v525, %v557
  %v590 = vmax.f32 %v526, %v558
  %v591 = vmax.f32 %v527, %v559
  %v592 = vmax.f32 %v528, %v560
  %v593 = vmax.f32 %v529, %v561
  %v594 = vmax.f32 %v530, %v562
  %v595 = vmax.f32 %v531, %v563
  %v596 = vmax.f32 %v532, %v564
  %v597 = vmax.f32 %v533, %v565
  %v598 = vmax.f32 %v534, %v566
  %v599 = vmax.f32 %v535, %v567
  %v600 = vmax.f32 %v536, %v568
  %v601 = vmax.f32 %v537, %v569
  %v602 = vmax.f32 %v538, %v570
  %603 = vst [vmem:[#allocation3] sm:$0xff] 0.0
  %604 = vst [vmem:[#allocation3 + $0x8] sm:$0xff] 0.0
  %605 = vst [vmem:[#allocation3 + $0x10] sm:$0xff] 0.0
  %606 = vst [vmem:[#allocation3 + $0x18] sm:$0xff] 0.0
  %607 = vst [vmem:[#allocation3 + $0x20] sm:$0xff] 0.0
  %608 = vst [vmem:[#allocation3 + $0x28] sm:$0xff] 0.0
  %609 = vst [vmem:[#allocation3 + $0x30] sm:$0xff] 0.0
  %610 = vst [vmem:[#allocation3 + $0x38] sm:$0xff] 0.0
  %611 = vst [vmem:[#allocation3 + $0x40] sm:$0xff] 0.0
  %612 = vst [vmem:[#allocation3 + $0x48] sm:$0xff] 0.0
  %613 = vst [vmem:[#allocation3 + $0x50] sm:$0xff] 0.0
  %614 = vst [vmem:[#allocation3 + $0x58] sm:$0xff] 0.0
  %615 = vst [vmem:[#allocation3 + $0x60] sm:$0xff] 0.0
  %616 = vst [vmem:[#allocation3 + $0x68] sm:$0xff] 0.0
  %617 = vst [vmem:[#allocation3 + $0x70] sm:$0xff] 0.0
  %618 = vst [vmem:[#allocation3 + $0x78] sm:$0xff] 0.0
  %619 = vst [vmem:[#allocation3 + $0x80] sm:$0xff] 0.0
  %620 = vst [vmem:[#allocation3 + $0x88] sm:$0xff] 0.0
  %621 = vst [vmem:[#allocation3 + $0x90] sm:$0xff] 0.0
  %622 = vst [vmem:[#allocation3 + $0x98] sm:$0xff] 0.0
  %623 = vst [vmem:[#allocation3 + $0xa0] sm:$0xff] 0.0
  %624 = vst [vmem:[#allocation3 + $0xa8] sm:$0xff] 0.0
  %625 = vst [vmem:[#allocation3 + $0xb0] sm:$0xff] 0.0
  %626 = vst [vmem:[#allocation3 + $0xb8] sm:$0xff] 0.0
  %627 = vst [vmem:[#allocation3 + $0xc0] sm:$0xff] 0.0
  %628 = vst [vmem:[#allocation3 + $0xc8] sm:$0xff] 0.0
  %629 = vst [vmem:[#allocation3 + $0xd0] sm:$0xff] 0.0
  %630 = vst [vmem:[#allocation3 + $0xd8] sm:$0xff] 0.0
  %631 = vst [vmem:[#allocation3 + $0xe0] sm:$0xff] 0.0
  %632 = vst [vmem:[#allocation3 + $0xe8] sm:$0xff] 0.0
  %633 = vst [vmem:[#allocation3 + $0xf0] sm:$0xff] 0.0
  %634 = vst [vmem:[#allocation3 + $0xf8] sm:$0xff] 0.0
  %635 = vst [vmem:[#allocation3 + $0x100] sm:$0xff] 0.0
  %636 = vst [vmem:[#allocation3 + $0x108] sm:$0xff] 0.0
  %637 = vst [vmem:[#allocation3 + $0x110] sm:$0xff] 0.0
  %638 = vst [vmem:[#allocation3 + $0x118] sm:$0xff] 0.0
  %639 = vst [vmem:[#allocation3 + $0x120] sm:$0xff] 0.0
  %640 = vst [vmem:[#allocation3 + $0x128] sm:$0xff] 0.0
  %641 = vst [vmem:[#allocation3 + $0x130] sm:$0xff] 0.0
  %642 = vst [vmem:[#allocation3 + $0x138] sm:$0xff] 0.0
  %643 = vst [vmem:[#allocation3 + $0x140] sm:$0xff] 0.0
  %644 = vst [vmem:[#allocation3 + $0x148] sm:$0xff] 0.0
  %645 = vst [vmem:[#allocation3 + $0x150] sm:$0xff] 0.0
  %646 = vst [vmem:[#allocation3 + $0x158] sm:$0xff] 0.0
  %s647 = scalar_lea.vmem [#allocation3], 48
  %648 = vst [vmem:[%s647] sm:$0xff] %v571
  %649 = vst [vmem:[%s647 + $0x8] sm:$0xff] %v572
  %650 = vst [vmem:[%s647 + $0x10] sm:$0xff] %v573
  %651 = vst [vmem:[%s647 + $0x18] sm:$0xff] %v574
  %652 = vst [vmem:[%s647 + $0x20] sm:$0xff] %v575
  %653 = vst [vmem:[%s647 + $0x28] sm:$0xff] %v576
  %654 = vst [vmem:[%s647 + $0x30] sm:$0xff] %v577
  %655 = vst [vmem:[%s647 + $0x38] sm:$0xff] %v578
  %656 = vst [vmem:[%s647 + $0x40] sm:$0xff] %v579
  %657 = vst [vmem:[%s647 + $0x48] sm:$0xff] %v580
  %658 = vst [vmem:[%s647 + $0x50] sm:$0xff] %v581
  %659 = vst [vmem:[%s647 + $0x58] sm:$0xff] %v582
  %660 = vst [vmem:[%s647 + $0x60] sm:$0xff] %v583
  %661 = vst [vmem:[%s647 + $0x68] sm:$0xff] %v584
  %662 = vst [vmem:[%s647 + $0x70] sm:$0xff] %v585
  %663 = vst [vmem:[%s647 + $0x78] sm:$0xff] %v586
  %664 = vst [vmem:[%s647 + $0x80] sm:$0xff] %v587
  %665 = vst [vmem:[%s647 + $0x88] sm:$0xff] %v588
  %666 = vst [vmem:[%s647 + $0x90] sm:$0xff] %v589
  %667 = vst [vmem:[%s647 + $0x98] sm:$0xff] %v590
  %668 = vst [vmem:[%s647 + $0xa0] sm:$0xff] %v591
  %669 = vst [vmem:[%s647 + $0xa8] sm:$0xff] %v592
  %670 = vst [vmem:[%s647 + $0xb0] sm:$0xff] %v593
  %671 = vst [vmem:[%s647 + $0xb8] sm:$0xff] %v594
  %672 = vst [vmem:[%s647 + $0xc0] sm:$0xff] %v595
  %673 = vst [vmem:[%s647 + $0xc8] sm:$0xff] %v596
  %674 = vst [vmem:[%s647 + $0xd0] sm:$0xff] %v597
  %675 = vst [vmem:[%s647 + $0xd8] sm:$0xff] %v598
  %676 = vst [vmem:[%s647 + $0xe0] sm:$0xff] %v599
  %677 = vst [vmem:[%s647 + $0xe8] sm:$0xff] %v600
  %678 = vst [vmem:[%s647 + $0xf0] sm:$0xff] %v601
  %679 = vst [vmem:[%s647 + $0xf8] sm:$0xff] %v602
  %v680 = vld [vmem:[#allocation3] sm:$0xff]
  %v681 = vld [vmem:[#allocation3 + $0x8] sm:$0xff]
  %v682 = vld [vmem:[#allocation3 + $0x10] sm:$0xff]
  %v683 = vld [vmem:[#allocation3 + $0x18] sm:$0xff]
  %v684 = vld [vmem:[#allocation3 + $0x20] sm:$0xff]
  %v685 = vld [vmem:[#allocation3 + $0x28] sm:$0xff]
  %v686 = vld [vmem:[#allocation3 + $0x30] sm:$0xff]
  %v687 = vld [vmem:[#allocation3 + $0x38] sm:$0xff]
  %v688 = vld [vmem:[#allocation3 + $0x40] sm:$0xff]
  %v689 = vld [vmem:[#allocation3 + $0x48] sm:$0xff]
  %v690 = vld [vmem:[#allocation3 + $0x50] sm:$0xff]
  %v691 = vld [vmem:[#allocation3 + $0x58] sm:$0xff]
  %v692 = vld [vmem:[#allocation3 + $0x60] sm:$0xff]
  %v693 = vld [vmem:[#allocation3 + $0x68] sm:$0xff]
  %v694 = vld [vmem:[#allocation3 + $0x70] sm:$0xff]
  %v695 = vld [vmem:[#allocation3 + $0x78] sm:$0xff]
  %v696 = vld [vmem:[#allocation3 + $0x80] sm:$0xff]
  %v697 = vld [vmem:[#allocation3 + $0x88] sm:$0xff]
  %v698 = vld [vmem:[#allocation3 + $0x90] sm:$0xff]
  %v699 = vld [vmem:[#allocation3 + $0x98] sm:$0xff]
  %v700 = vld [vmem:[#allocation3 + $0xa0] sm:$0xff]
  %v701 = vld [vmem:[#allocation3 + $0xa8] sm:$0xff]
  %v702 = vld [vmem:[#allocation3 + $0xb0] sm:$0xff]
  %v703 = vld [vmem:[#allocation3 + $0xb8] sm:$0xff]
  %v704 = vld [vmem:[#allocation3 + $0xc0] sm:$0xff]
  %v705 = vld [vmem:[#allocation3 + $0xc8] sm:$0xff]
  %v706 = vld [vmem:[#allocation3 + $0xd0] sm:$0xff]
  %v707 = vld [vmem:[#allocation3 + $0xd8] sm:$0xff]
  %v708 = vld [vmem:[#allocation3 + $0xe0] sm:$0xff]
  %v709 = vld [vmem:[#allocation3 + $0xe8] sm:$0xff]
  %v710 = vld [vmem:[#allocation3 + $0xf0] sm:$0xff]
  %v711 = vld [vmem:[#allocation3 + $0xf8] sm:$0xff]
  %v712 = vmax.f32 %v571, %v680
  %v713 = vmax.f32 %v572, %v681
  %v714 = vmax.f32 %v573, %v682
  %v715 = vmax.f32 %v574, %v683
  %v716 = vmax.f32 %v575, %v684
  %v717 = vmax.f32 %v576, %v685
  %v718 = vmax.f32 %v577, %v686
  %v719 = vmax.f32 %v578, %v687
  %v720 = vmax.f32 %v579, %v688
  %v721 = vmax.f32 %v580, %v689
  %v722 = vmax.f32 %v581, %v690
  %v723 = vmax.f32 %v582, %v691
  %v724 = vmax.f32 %v583, %v692
  %v725 = vmax.f32 %v584, %v693
  %v726 = vmax.f32 %v585, %v694
  %v727 = vmax.f32 %v586, %v695
  %v728 = vmax.f32 %v587, %v696
  %v729 = vmax.f32 %v588, %v697
  %v730 = vmax.f32 %v589, %v698
  %v731 = vmax.f32 %v590, %v699
  %v732 = vmax.f32 %v591, %v700
  %v733 = vmax.f32 %v592, %v701
  %v734 = vmax.f32 %v593, %v702
  %v735 = vmax.f32 %v594, %v703
  %v736 = vmax.f32 %v595, %v704
  %v737 = vmax.f32 %v596, %v705
  %v738 = vmax.f32 %v597, %v706
  %v739 = vmax.f32 %v598, %v707
  %v740 = vmax.f32 %v599, %v708
  %v741 = vmax.f32 %v600, %v709
  %v742 = vmax.f32 %v601, %v710
  %v743 = vmax.f32 %v602, %v711
  %s744 = scalar_lea.vmem [#allocation3], 16
  %v745 = vld [vmem:[%s744] sm:$0xff]
  %v746 = vld [vmem:[%s744 + $0x8] sm:$0xff]
  %v747 = vld [vmem:[%s744 + $0x10] sm:$0xff]
  %v748 = vld [vmem:[%s744 + $0x18] sm:$0xff]
  %v749 = vld [vmem:[%s744 + $0x20] sm:$0xff]
  %v750 = vld [vmem:[%s744 + $0x28] sm:$0xff]
  %v751 = vld [vmem:[%s744 + $0x30] sm:$0xff]
  %v752 = vld [vmem:[%s744 + $0x38] sm:$0xff]
  %v753 = vld [vmem:[%s744 + $0x40] sm:$0xff]
  %v754 = vld [vmem:[%s744 + $0x48] sm:$0xff]
  %v755 = vld [vmem:[%s744 + $0x50] sm:$0xff]
  %v756 = vld [vmem:[%s744 + $0x58] sm:$0xff]
  %v757 = vld [vmem:[%s744 + $0x60] sm:$0xff]
  %v758 = vld [vmem:[%s744 + $0x68] sm:$0xff]
  %v759 = vld [vmem:[%s744 + $0x70] sm:$0xff]
  %v760 = vld [vmem:[%s744 + $0x78] sm:$0xff]
  %v761 = vld [vmem:[%s744 + $0x80] sm:$0xff]
  %v762 = vld [vmem:[%s744 + $0x88] sm:$0xff]
  %v763 = vld [vmem:[%s744 + $0x90] sm:$0xff]
  %v764 = vld [vmem:[%s744 + $0x98] sm:$0xff]
  %v765 = vld [vmem:[%s744 + $0xa0] sm:$0xff]
  %v766 = vld [vmem:[%s744 + $0xa8] sm:$0xff]
  %v767 = vld [vmem:[%s744 + $0xb0] sm:$0xff]
  %v768 = vld [vmem:[%s744 + $0xb8] sm:$0xff]
  %v769 = vld [vmem:[%s744 + $0xc0] sm:$0xff]
  %v770 = vld [vmem:[%s744 + $0xc8] sm:$0xff]
  %v771 = vld [vmem:[%s744 + $0xd0] sm:$0xff]
  %v772 = vld [vmem:[%s744 + $0xd8] sm:$0xff]
  %v773 = vld [vmem:[%s744 + $0xe0] sm:$0xff]
  %v774 = vld [vmem:[%s744 + $0xe8] sm:$0xff]
  %v775 = vld [vmem:[%s744 + $0xf0] sm:$0xff]
  %v776 = vld [vmem:[%s744 + $0xf8] sm:$0xff]
  %v777 = vmax.f32 %v712, %v745
  %v778 = vmax.f32 %v713, %v746
  %v779 = vmax.f32 %v714, %v747
  %v780 = vmax.f32 %v715, %v748
  %v781 = vmax.f32 %v716, %v749
  %v782 = vmax.f32 %v717, %v750
  %v783 = vmax.f32 %v718, %v751
  %v784 = vmax.f32 %v719, %v752
  %v785 = vmax.f32 %v720, %v753
  %v786 = vmax.f32 %v721, %v754
  %v787 = vmax.f32 %v722, %v755
  %v788 = vmax.f32 %v723, %v756
  %v789 = vmax.f32 %v724, %v757
  %v790 = vmax.f32 %v725, %v758
  %v791 = vmax.f32 %v726, %v759
  %v792 = vmax.f32 %v727, %v760
  %v793 = vmax.f32 %v728, %v761
  %v794 = vmax.f32 %v729, %v762
  %v795 = vmax.f32 %v730, %v763
  %v796 = vmax.f32 %v731, %v764
  %v797 = vmax.f32 %v732, %v765
  %v798 = vmax.f32 %v733, %v766
  %v799 = vmax.f32 %v734, %v767
  %v800 = vmax.f32 %v735, %v768
  %v801 = vmax.f32 %v736, %v769
  %v802 = vmax.f32 %v737, %v770
  %v803 = vmax.f32 %v738, %v771
  %v804 = vmax.f32 %v739, %v772
  %v805 = vmax.f32 %v740, %v773
  %v806 = vmax.f32 %v741, %v774
  %v807 = vmax.f32 %v742, %v775
  %v808 = vmax.f32 %v743, %v776
  %s809 = scalar_lea.vmem [#allocation3], 32
  %v810 = vld [vmem:[%s809] sm:$0xff]
  %v811 = vld [vmem:[%s809 + $0x8] sm:$0xff]
  %v812 = vld [vmem:[%s809 + $0x10] sm:$0xff]
  %v813 = vld [vmem:[%s809 + $0x18] sm:$0xff]
  %v814 = vld [vmem:[%s809 + $0x20] sm:$0xff]
  %v815 = vld [vmem:[%s809 + $0x28] sm:$0xff]
  %v816 = vld [vmem:[%s809 + $0x30] sm:$0xff]
  %v817 = vld [vmem:[%s809 + $0x38] sm:$0xff]
  %v818 = vld [vmem:[%s809 + $0x40] sm:$0xff]
  %v819 = vld [vmem:[%s809 + $0x48] sm:$0xff]
  %v820 = vld [vmem:[%s809 + $0x50] sm:$0xff]
  %v821 = vld [vmem:[%s809 + $0x58] sm:$0xff]
  %v822 = vld [vmem:[%s809 + $0x60] sm:$0xff]
  %v823 = vld [vmem:[%s809 + $0x68] sm:$0xff]
  %v824 = vld [vmem:[%s809 + $0x70] sm:$0xff]
  %v825 = vld [vmem:[%s809 + $0x78] sm:$0xff]
  %v826 = vld [vmem:[%s809 + $0x80] sm:$0xff]
  %v827 = vld [vmem:[%s809 + $0x88] sm:$0xff]
  %v828 = vld [vmem:[%s809 + $0x90] sm:$0xff]
  %v829 = vld [vmem:[%s809 + $0x98] sm:$0xff]
  %v830 = vld [vmem:[%s809 + $0xa0] sm:$0xff]
  %v831 = vld [vmem:[%s809 + $0xa8] sm:$0xff]
  %v832 = vld [vmem:[%s809 + $0xb0] sm:$0xff]
  %v833 = vld [vmem:[%s809 + $0xb8] sm:$0xff]
  %v834 = vld [vmem:[%s809 + $0xc0] sm:$0xff]
  %v835 = vld [vmem:[%s809 + $0xc8] sm:$0xff]
  %v836 = vld [vmem:[%s809 + $0xd0] sm:$0xff]
  %v837 = vld [vmem:[%s809 + $0xd8] sm:$0xff]
  %v838 = vld [vmem:[%s809 + $0xe0] sm:$0xff]
  %v839 = vld [vmem:[%s809 + $0xe8] sm:$0xff]
  %v840 = vld [vmem:[%s809 + $0xf0] sm:$0xff]
  %v841 = vld [vmem:[%s809 + $0xf8] sm:$0xff]
  %v842 = vmax.f32 %v777, %v810
  %v843 = vmax.f32 %v778, %v811
  %v844 = vmax.f32 %v779, %v812
  %v845 = vmax.f32 %v780, %v813
  %v846 = vmax.f32 %v781, %v814
  %v847 = vmax.f32 %v782, %v815
  %v848 = vmax.f32 %v783, %v816
  %v849 = vmax.f32 %v784, %v817
  %v850 = vmax.f32 %v785, %v818
  %v851 = vmax.f32 %v786, %v819
  %v852 = vmax.f32 %v787, %v820
  %v853 = vmax.f32 %v788, %v821
  %v854 = vmax.f32 %v789, %v822
  %v855 = vmax.f32 %v790, %v823
  %v856 = vmax.f32 %v791, %v824
  %v857 = vmax.f32 %v792, %v825
  %v858 = vmax.f32 %v793, %v826
  %v859 = vmax.f32 %v794, %v827
  %v860 = vmax.f32 %v795, %v828
  %v861 = vmax.f32 %v796, %v829
  %v862 = vmax.f32 %v797, %v830
  %v863 = vmax.f32 %v798, %v831
  %v864 = vmax.f32 %v799, %v832
  %v865 = vmax.f32 %v800, %v833
  %v866 = vmax.f32 %v801, %v834
  %v867 = vmax.f32 %v802, %v835
  %v868 = vmax.f32 %v803, %v836
  %v869 = vmax.f32 %v804, %v837
  %v870 = vmax.f32 %v805, %v838
  %v871 = vmax.f32 %v806, %v839
  %v872 = vmax.f32 %v807, %v840
  %v873 = vmax.f32 %v808, %v841
  %s874 = scalar_lea.vmem [#allocation3], 64
  %v875 = vld [vmem:[%s874] sm:$0xff]
  %v876 = vld [vmem:[%s874 + $0x8] sm:$0xff]
  %v877 = vld [vmem:[%s874 + $0x10] sm:$0xff]
  %v878 = vld [vmem:[%s874 + $0x18] sm:$0xff]
  %v879 = vld [vmem:[%s874 + $0x20] sm:$0xff]
  %v880 = vld [vmem:[%s874 + $0x28] sm:$0xff]
  %v881 = vld [vmem:[%s874 + $0x30] sm:$0xff]
  %v882 = vld [vmem:[%s874 + $0x38] sm:$0xff]
  %v883 = vld [vmem:[%s874 + $0x40] sm:$0xff]
  %v884 = vld [vmem:[%s874 + $0x48] sm:$0xff]
  %v885 = vld [vmem:[%s874 + $0x50] sm:$0xff]
  %v886 = vld [vmem:[%s874 + $0x58] sm:$0xff]
  %v887 = vld [vmem:[%s874 + $0x60] sm:$0xff]
  %v888 = vld [vmem:[%s874 + $0x68] sm:$0xff]
  %v889 = vld [vmem:[%s874 + $0x70] sm:$0xff]
  %v890 = vld [vmem:[%s874 + $0x78] sm:$0xff]
  %v891 = vld [vmem:[%s874 + $0x80] sm:$0xff]
  %v892 = vld [vmem:[%s874 + $0x88] sm:$0xff]
  %v893 = vld [vmem:[%s874 + $0x90] sm:$0xff]
  %v894 = vld [vmem:[%s874 + $0x98] sm:$0xff]
  %v895 = vld [vmem:[%s874 + $0xa0] sm:$0xff]
  %v896 = vld [vmem:[%s874 + $0xa8] sm:$0xff]
  %v897 = vld [vmem:[%s874 + $0xb0] sm:$0xff]
  %v898 = vld [vmem:[%s874 + $0xb8] sm:$0xff]
  %v899 = vld [vmem:[%s874 + $0xc0] sm:$0xff]
  %v900 = vld [vmem:[%s874 + $0xc8] sm:$0xff]
  %v901 = vld [vmem:[%s874 + $0xd0] sm:$0xff]
  %v902 = vld [vmem:[%s874 + $0xd8] sm:$0xff]
  %v903 = vld [vmem:[%s874 + $0xe0] sm:$0xff]
  %v904 = vld [vmem:[%s874 + $0xe8] sm:$0xff]
  %v905 = vld [vmem:[%s874 + $0xf0] sm:$0xff]
  %v906 = vld [vmem:[%s874 + $0xf8] sm:$0xff]
  %v907 = vmax.f32 %v842, %v875
  %v908 = vmax.f32 %v843, %v876
  %v909 = vmax.f32 %v844, %v877
  %v910 = vmax.f32 %v845, %v878
  %v911 = vmax.f32 %v846, %v879
  %v912 = vmax.f32 %v847, %v880
  %v913 = vmax.f32 %v848, %v881
  %v914 = vmax.f32 %v849, %v882
  %v915 = vmax.f32 %v850, %v883
  %v916 = vmax.f32 %v851, %v884
  %v917 = vmax.f32 %v852, %v885
  %v918 = vmax.f32 %v853, %v886
  %v919 = vmax.f32 %v854, %v887
  %v920 = vmax.f32 %v855, %v888
  %v921 = vmax.f32 %v856, %v889
  %v922 = vmax.f32 %v857, %v890
  %v923 = vmax.f32 %v858, %v891
  %v924 = vmax.f32 %v859, %v892
  %v925 = vmax.f32 %v860, %v893
  %v926 = vmax.f32 %v861, %v894
  %v927 = vmax.f32 %v862, %v895
  %v928 = vmax.f32 %v863, %v896
  %v929 = vmax.f32 %v864, %v897
  %v930 = vmax.f32 %v865, %v898
  %v931 = vmax.f32 %v866, %v899
  %v932 = vmax.f32 %v867, %v900
  %v933 = vmax.f32 %v868, %v901
  %v934 = vmax.f32 %v869, %v902
  %v935 = vmax.f32 %v870, %v903
  %v936 = vmax.f32 %v871, %v904
  %v937 = vmax.f32 %v872, %v905
  %v938 = vmax.f32 %v873, %v906
  %s939 = scalar_lea.vmem [#allocation3], 80
  %v940 = vld [vmem:[%s939] sm:$0xff]
  %v941 = vld [vmem:[%s939 + $0x8] sm:$0xff]
  %v942 = vld [vmem:[%s939 + $0x10] sm:$0xff]
  %v943 = vld [vmem:[%s939 + $0x18] sm:$0xff]
  %v944 = vld [vmem:[%s939 + $0x20] sm:$0xff]
  %v945 = vld [vmem:[%s939 + $0x28] sm:$0xff]
  %v946 = vld [vmem:[%s939 + $0x30] sm:$0xff]
  %v947 = vld [vmem:[%s939 + $0x38] sm:$0xff]
  %v948 = vld [vmem:[%s939 + $0x40] sm:$0xff]
  %v949 = vld [vmem:[%s939 + $0x48] sm:$0xff]
  %v950 = vld [vmem:[%s939 + $0x50] sm:$0xff]
  %v951 = vld [vmem:[%s939 + $0x58] sm:$0xff]
  %v952 = vld [vmem:[%s939 + $0x60] sm:$0xff]
  %v953 = vld [vmem:[%s939 + $0x68] sm:$0xff]
  %v954 = vld [vmem:[%s939 + $0x70] sm:$0xff]
  %v955 = vld [vmem:[%s939 + $0x78] sm:$0xff]
  %v956 = vld [vmem:[%s939 + $0x80] sm:$0xff]
  %v957 = vld [vmem:[%s939 + $0x88] sm:$0xff]
  %v958 = vld [vmem:[%s939 + $0x90] sm:$0xff]
  %v959 = vld [vmem:[%s939 + $0x98] sm:$0xff]
  %v960 = vld [vmem:[%s939 + $0xa0] sm:$0xff]
  %v961 = vld [vmem:[%s939 + $0xa8] sm:$0xff]
  %v962 = vld [vmem:[%s939 + $0xb0] sm:$0xff]
  %v963 = vld [vmem:[%s939 + $0xb8] sm:$0xff]
  %v964 = vld [vmem:[%s939 + $0xc0] sm:$0xff]
  %v965 = vld [vmem:[%s939 + $0xc8] sm:$0xff]
  %v966 = vld [vmem:[%s939 + $0xd0] sm:$0xff]
  %v967 = vld [vmem:[%s939 + $0xd8] sm:$0xff]
  %v968 = vld [vmem:[%s939 + $0xe0] sm:$0xff]
  %v969 = vld [vmem:[%s939 + $0xe8] sm:$0xff]
  %v970 = vld [vmem:[%s939 + $0xf0] sm:$0xff]
  %v971 = vld [vmem:[%s939 + $0xf8] sm:$0xff]
  %v972 = vmax.f32 %v907, %v940
  %v973 = vmax.f32 %v908, %v941
  %v974 = vmax.f32 %v909, %v942
  %v975 = vmax.f32 %v910, %v943
  %v976 = vmax.f32 %v911, %v944
  %v977 = vmax.f32 %v912, %v945
  %v978 = vmax.f32 %v913, %v946
  %v979 = vmax.f32 %v914, %v947
  %v980 = vmax.f32 %v915, %v948
  %v981 = vmax.f32 %v916, %v949
  %v982 = vmax.f32 %v917, %v950
  %v983 = vmax.f32 %v918, %v951
  %v984 = vmax.f32 %v919, %v952
  %v985 = vmax.f32 %v920, %v953
  %v986 = vmax.f32 %v921, %v954
  %v987 = vmax.f32 %v922, %v955
  %v988 = vmax.f32 %v923, %v956
  %v989 = vmax.f32 %v924, %v957
  %v990 = vmax.f32 %v925, %v958
  %v991 = vmax.f32 %v926, %v959
  %v992 = vmax.f32 %v927, %v960
  %v993 = vmax.f32 %v928, %v961
  %v994 = vmax.f32 %v929, %v962
  %v995 = vmax.f32 %v930, %v963
  %v996 = vmax.f32 %v931, %v964
  %v997 = vmax.f32 %v932, %v965
  %v998 = vmax.f32 %v933, %v966
  %v999 = vmax.f32 %v934, %v967
  %v1000 = vmax.f32 %v935, %v968
  %v1001 = vmax.f32 %v936, %v969
  %v1002 = vmax.f32 %v937, %v970
  %v1003 = vmax.f32 %v938, %v971
  %s1004 = scalar_lea.vmem [#allocation3], 96
  %v1005 = vld [vmem:[%s1004] sm:$0xff]
  %v1006 = vld [vmem:[%s1004 + $0x8] sm:$0xff]
  %v1007 = vld [vmem:[%s1004 + $0x10] sm:$0xff]
  %v1008 = vld [vmem:[%s1004 + $0x18] sm:$0xff]
  %v1009 = vld [vmem:[%s1004 + $0x20] sm:$0xff]
  %v1010 = vld [vmem:[%s1004 + $0x28] sm:$0xff]
  %v1011 = vld [vmem:[%s1004 + $0x30] sm:$0xff]
  %v1012 = vld [vmem:[%s1004 + $0x38] sm:$0xff]
  %v1013 = vld [vmem:[%s1004 + $0x40] sm:$0xff]
  %v1014 = vld [vmem:[%s1004 + $0x48] sm:$0xff]
  %v1015 = vld [vmem:[%s1004 + $0x50] sm:$0xff]
  %v1016 = vld [vmem:[%s1004 + $0x58] sm:$0xff]
  %v1017 = vld [vmem:[%s1004 + $0x60] sm:$0xff]
  %v1018 = vld [vmem:[%s1004 + $0x68] sm:$0xff]
  %v1019 = vld [vmem:[%s1004 + $0x70] sm:$0xff]
  %v1020 = vld [vmem:[%s1004 + $0x78] sm:$0xff]
  %v1021 = vld [vmem:[%s1004 + $0x80] sm:$0xff]
  %v1022 = vld [vmem:[%s1004 + $0x88] sm:$0xff]
  %v1023 = vld [vmem:[%s1004 + $0x90] sm:$0xff]
  %v1024 = vld [vmem:[%s1004 + $0x98] sm:$0xff]
  %v1025 = vld [vmem:[%s1004 + $0xa0] sm:$0xff]
  %v1026 = vld [vmem:[%s1004 + $0xa8] sm:$0xff]
  %v1027 = vld [vmem:[%s1004 + $0xb0] sm:$0xff]
  %v1028 = vld [vmem:[%s1004 + $0xb8] sm:$0xff]
  %v1029 = vld [vmem:[%s1004 + $0xc0] sm:$0xff]
  %v1030 = vld [vmem:[%s1004 + $0xc8] sm:$0xff]
  %v1031 = vld [vmem:[%s1004 + $0xd0] sm:$0xff]
  %v1032 = vld [vmem:[%s1004 + $0xd8] sm:$0xff]
  %v1033 = vld [vmem:[%s1004 + $0xe0] sm:$0xff]
  %v1034 = vld [vmem:[%s1004 + $0xe8] sm:$0xff]
  %v1035 = vld [vmem:[%s1004 + $0xf0] sm:$0xff]
  %v1036 = vld [vmem:[%s1004 + $0xf8] sm:$0xff]
  %v1037 = vmax.f32 %v972, %v1005
  %v1038 = vmax.f32 %v973, %v1006
  %v1039 = vmax.f32 %v974, %v1007
  %v1040 = vmax.f32 %v975, %v1008
  %v1041 = vmax.f32 %v976, %v1009
  %v1042 = vmax.f32 %v977, %v1010
  %v1043 = vmax.f32 %v978, %v1011
  %v1044 = vmax.f32 %v979, %v1012
  %v1045 = vmax.f32 %v980, %v1013
  %v1046 = vmax.f32 %v981, %v1014
  %v1047 = vmax.f32 %v982, %v1015
  %v1048 = vmax.f32 %v983, %v1016
  %v1049 = vmax.f32 %v984, %v1017
  %v1050 = vmax.f32 %v985, %v1018
  %v1051 = vmax.f32 %v986, %v1019
  %v1052 = vmax.f32 %v987, %v1020
  %v1053 = vmax.f32 %v988, %v1021
  %v1054 = vmax.f32 %v989, %v1022
  %v1055 = vmax.f32 %v990, %v1023
  %v1056 = vmax.f32 %v991, %v1024
  %v1057 = vmax.f32 %v992, %v1025
  %v1058 = vmax.f32 %v993, %v1026
  %v1059 = vmax.f32 %v994, %v1027
  %v1060 = vmax.f32 %v995, %v1028
  %v1061 = vmax.f32 %v996, %v1029
  %v1062 = vmax.f32 %v997, %v1030
  %v1063 = vmax.f32 %v998, %v1031
  %v1064 = vmax.f32 %v999, %v1032
  %v1065 = vmax.f32 %v1000, %v1033
  %v1066 = vmax.f32 %v1001, %v1034
  %v1067 = vmax.f32 %v1002, %v1035
  %v1068 = vmax.f32 %v1003, %v1036
  %v1069 = vsub.f32 1.0, %v1037
  %v1070 = vsub.f32 1.0, %v1038
  %v1071 = vsub.f32 1.0, %v1039
  %v1072 = vsub.f32 1.0, %v1040
  %v1073 = vsub.f32 1.0, %v1041
  %v1074 = vsub.f32 1.0, %v1042
  %v1075 = vsub.f32 1.0, %v1043
  %v1076 = vsub.f32 1.0, %v1044
  %v1077 = vsub.f32 1.0, %v1045
  %v1078 = vsub.f32 1.0, %v1046
  %v1079 = vsub.f32 1.0, %v1047
  %v1080 = vsub.f32 1.0, %v1048
  %v1081 = vsub.f32 1.0, %v1049
  %v1082 = vsub.f32 1.0, %v1050
  %v1083 = vsub.f32 1.0, %v1051
  %v1084 = vsub.f32 1.0, %v1052
  %v1085 = vsub.f32 1.0, %v1053
  %v1086 = vsub.f32 1.0, %v1054
  %v1087 = vsub.f32 1.0, %v1055
  %v1088 = vsub.f32 1.0, %v1056
  %v1089 = vsub.f32 1.0, %v1057
  %v1090 = vsub.f32 1.0, %v1058
  %v1091 = vsub.f32 1.0, %v1059
  %v1092 = vsub.f32 1.0, %v1060
  %v1093 = vsub.f32 1.0, %v1061
  %v1094 = vsub.f32 1.0, %v1062
  %v1095 = vsub.f32 1.0, %v1063
  %v1096 = vsub.f32 1.0, %v1064
  %v1097 = vsub.f32 1.0, %v1065
  %v1098 = vsub.f32 1.0, %v1066
  %v1099 = vsub.f32 1.0, %v1067
  %v1100 = vsub.f32 1.0, %v1068
  %v1101 = vadd.f32 %v1069, %v1070
  %v1102 = vadd.f32 %v1101, %v1071
  %v1103 = vadd.f32 %v1102, %v1072
  %v1104 = vadd.f32 %v1103, %v1073
  %v1105 = vadd.f32 %v1104, %v1074
  %v1106 = vadd.f32 %v1105, %v1075
  %v1107 = vadd.f32 %v1106, %v1076
  %v1108 = vadd.f32 %v1107, %v1077
  %v1109 = vadd.f32 %v1108, %v1078
  %v1110 = vadd.f32 %v1109, %v1079
  %v1111 = vadd.f32 %v1110, %v1080
  %v1112 = vadd.f32 %v1111, %v1081
  %v1113 = vadd.f32 %v1112, %v1082
  %v1114 = vadd.f32 %v1113, %v1083
  %v1115 = vadd.f32 %v1114, %v1084
  %v1116 = vadd.f32 %v1115, %v1085
  %v1117 = vadd.f32 %v1116, %v1086
  %v1118 = vadd.f32 %v1117, %v1087
  %v1119 = vadd.f32 %v1118, %v1088
  %v1120 = vadd.f32 %v1119, %v1089
  %v1121 = vadd.f32 %v1120, %v1090
  %v1122 = vadd.f32 %v1121, %v1091
  %v1123 = vadd.f32 %v1122, %v1092
  %v1124 = vadd.f32 %v1123, %v1093
  %v1125 = vadd.f32 %v1124, %v1094
  %v1126 = vadd.f32 %v1125, %v1095
  %v1127 = vadd.f32 %v1126, %v1096
  %v1128 = vadd.f32 %v1127, %v1097
  %v1129 = vadd.f32 %v1128, %v1098
  %v1130 = vadd.f32 %v1129, %v1099
  %v1131 = vadd.f32 %v1130, %v1100
  %1132 = vadd.xlane.f32.xlu0 %v1131
  %v1133 = vpop.xlane.xlu0 %1132
  %v1134 = vrot.slane %v1133, 4
  %v1135 = vadd.f32 %v1133, %v1134
  %v1136 = vrot.slane %v1135, 2
  %v1137 = vadd.f32 %v1135, %v1136
  %v1138 = vrot.slane %v1137, 1
  %v1139 = vadd.f32 %v1137, %v1138
  %s1140 = vtos %v1139
  %s1141 = sadd.f32 %s1140, 1e-07
  %v1142 = vstv %s1141
  %v1143 = vrcp.pop %v1142
  %v1144 = vmul.f32 %v1142, %v1143
  %v1145 = vsub.f32 1.0, %v1144
  %v1146 = vmul.f32 %v1143, %v1145
  %v1147 = vadd.f32 %v1143, %v1146
  %vm1148 = vweird.f32 %v1142
  %vm1149 = vweird.f32 %v1143
  %vm1150 = vmor %vm1148, %vm1149
  %v1151 = vsel %vm1150, %v1143, %v1147
  %v1152 = vand.u32 2147483647, %v1142
  %vm1153 = vcmp.eq.f32.partialorder %v1152, 8.507059e+37
  %v1154 = vand.u32 %v1142, 2147483648
  %v1155 = vor.u32 1.1754944e-38, %v1154
  %v1156 = vsel %vm1153, %v1155, %v1151
  %s1157 = vtos %v1156
  %s1158 = smul.f32 2048.0, %s1157
  %v1159 = vld [vmem:[%s0] sm:$0xff]
  %v1160 = vld [vmem:[%s0 + $0x8] sm:$0xff]
  %v1161 = vld [vmem:[%s0 + $0x10] sm:$0xff]
  %v1162 = vld [vmem:[%s0 + $0x18] sm:$0xff]
  %v1163 = vld [vmem:[%s0 + $0x20] sm:$0xff]
  %v1164 = vld [vmem:[%s0 + $0x28] sm:$0xff]
  %v1165 = vld [vmem:[%s0 + $0x30] sm:$0xff]
  %v1166 = vld [vmem:[%s0 + $0x38] sm:$0xff]
  %v1167 = vld [vmem:[%s0 + $0x40] sm:$0xff]
  %v1168 = vld [vmem:[%s0 + $0x48] sm:$0xff]
  %v1169 = vld [vmem:[%s0 + $0x50] sm:$0xff]
  %v1170 = vld [vmem:[%s0 + $0x58] sm:$0xff]
  %v1171 = vld [vmem:[%s0 + $0x60] sm:$0xff]
  %v1172 = vld [vmem:[%s0 + $0x68] sm:$0xff]
  %v1173 = vld [vmem:[%s0 + $0x70] sm:$0xff]
  %v1174 = vld [vmem:[%s0 + $0x78] sm:$0xff]
  %v1175 = vld [vmem:[%s0 + $0x80] sm:$0xff]
  %v1176 = vld [vmem:[%s0 + $0x88] sm:$0xff]
  %v1177 = vld [vmem:[%s0 + $0x90] sm:$0xff]
  %v1178 = vld [vmem:[%s0 + $0x98] sm:$0xff]
  %v1179 = vld [vmem:[%s0 + $0xa0] sm:$0xff]
  %v1180 = vld [vmem:[%s0 + $0xa8] sm:$0xff]
  %v1181 = vld [vmem:[%s0 + $0xb0] sm:$0xff]
  %v1182 = vld [vmem:[%s0 + $0xb8] sm:$0xff]
  %v1183 = vld [vmem:[%s0 + $0xc0] sm:$0xff]
  %v1184 = vld [vmem:[%s0 + $0xc8] sm:$0xff]
  %v1185 = vld [vmem:[%s0 + $0xd0] sm:$0xff]
  %v1186 = vld [vmem:[%s0 + $0xd8] sm:$0xff]
  %v1187 = vld [vmem:[%s0 + $0xe0] sm:$0xff]
  %v1188 = vld [vmem:[%s0 + $0xe8] sm:$0xff]
  %v1189 = vld [vmem:[%s0 + $0xf0] sm:$0xff]
  %v1190 = vld [vmem:[%s0 + $0xf8] sm:$0xff]
  %v1191 = vmul.f32 %v1159, %v1069
  %v1192 = vmul.f32 %v1160, %v1070
  %v1193 = vmul.f32 %v1161, %v1071
  %v1194 = vmul.f32 %v1162, %v1072
  %v1195 = vmul.f32 %v1163, %v1073
  %v1196 = vmul.f32 %v1164, %v1074
  %v1197 = vmul.f32 %v1165, %v1075
  %v1198 = vmul.f32 %v1166, %v1076
  %v1199 = vmul.f32 %v1167, %v1077
  %v1200 = vmul.f32 %v1168, %v1078
  %v1201 = vmul.f32 %v1169, %v1079
  %v1202 = vmul.f32 %v1170, %v1080
  %v1203 = vmul.f32 %v1171, %v1081
  %v1204 = vmul.f32 %v1172, %v1082
  %v1205 = vmul.f32 %v1173, %v1083
  %v1206 = vmul.f32 %v1174, %v1084
  %v1207 = vmul.f32 %v1175, %v1085
  %v1208 = vmul.f32 %v1176, %v1086
  %v1209 = vmul.f32 %v1177, %v1087
  %v1210 = vmul.f32 %v1178, %v1088
  %v1211 = vmul.f32 %v1179, %v1089
  %v1212 = vmul.f32 %v1180, %v1090
  %v1213 = vmul.f32 %v1181, %v1091
  %v1214 = vmul.f32 %v1182, %v1092
  %v1215 = vmul.f32 %v1183, %v1093
  %v1216 = vmul.f32 %v1184, %v1094
  %v1217 = vmul.f32 %v1185, %v1095
  %v1218 = vmul.f32 %v1186, %v1096
  %v1219 = vmul.f32 %v1187, %v1097
  %v1220 = vmul.f32 %v1188, %v1098
  %v1221 = vmul.f32 %v1189, %v1099
  %v1222 = vmul.f32 %v1190, %v1100
  %v1223 = vstv %s1158
  %v1224 = vmul.f32 %v1191, %v1223
  %v1225 = vmul.f32 %v1192, %v1223
  %v1226 = vmul.f32 %v1193, %v1223
  %v1227 = vmul.f32 %v1194, %v1223
  %v1228 = vmul.f32 %v1195, %v1223
  %v1229 = vmul.f32 %v1196, %v1223
  %v1230 = vmul.f32 %v1197, %v1223
  %v1231 = vmul.f32 %v1198, %v1223
  %v1232 = vmul.f32 %v1199, %v1223
  %v1233 = vmul.f32 %v1200, %v1223
  %v1234 = vmul.f32 %v1201, %v1223
  %v1235 = vmul.f32 %v1202, %v1223
  %v1236 = vmul.f32 %v1203, %v1223
  %v1237 = vmul.f32 %v1204, %v1223
  %v1238 = vmul.f32 %v1205, %v1223
  %v1239 = vmul.f32 %v1206, %v1223
  %v1240 = vmul.f32 %v1207, %v1223
  %v1241 = vmul.f32 %v1208, %v1223
  %v1242 = vmul.f32 %v1209, %v1223
  %v1243 = vmul.f32 %v1210, %v1223
  %v1244 = vmul.f32 %v1211, %v1223
  %v1245 = vmul.f32 %v1212, %v1223
  %v1246 = vmul.f32 %v1213, %v1223
  %v1247 = vmul.f32 %v1214, %v1223
  %v1248 = vmul.f32 %v1215, %v1223
  %v1249 = vmul.f32 %v1216, %v1223
  %v1250 = vmul.f32 %v1217, %v1223
  %v1251 = vmul.f32 %v1218, %v1223
  %v1252 = vmul.f32 %v1219, %v1223
  %v1253 = vmul.f32 %v1220, %v1223
  %v1254 = vmul.f32 %v1221, %v1223
  %v1255 = vmul.f32 %v1222, %v1223
  %1256 = vst [vmem:[%s2] sm:$0xff] %v1224
  %1257 = vst [vmem:[%s2 + $0x8] sm:$0xff] %v1225
  %1258 = vst [vmem:[%s2 + $0x10] sm:$0xff] %v1226
  %1259 = vst [vmem:[%s2 + $0x18] sm:$0xff] %v1227
  %1260 = vst [vmem:[%s2 + $0x20] sm:$0xff] %v1228
  %1261 = vst [vmem:[%s2 + $0x28] sm:$0xff] %v1229
  %1262 = vst [vmem:[%s2 + $0x30] sm:$0xff] %v1230
  %1263 = vst [vmem:[%s2 + $0x38] sm:$0xff] %v1231
  %1264 = vst [vmem:[%s2 + $0x40] sm:$0xff] %v1232
  %1265 = vst [vmem:[%s2 + $0x48] sm:$0xff] %v1233
  %1266 = vst [vmem:[%s2 + $0x50] sm:$0xff] %v1234
  %1267 = vst [vmem:[%s2 + $0x58] sm:$0xff] %v1235
  %1268 = vst [vmem:[%s2 + $0x60] sm:$0xff] %v1236
  %1269 = vst [vmem:[%s2 + $0x68] sm:$0xff] %v1237
  %1270 = vst [vmem:[%s2 + $0x70] sm:$0xff] %v1238
  %1271 = vst [vmem:[%s2 + $0x78] sm:$0xff] %v1239
  %1272 = vst [vmem:[%s2 + $0x80] sm:$0xff] %v1240
  %1273 = vst [vmem:[%s2 + $0x88] sm:$0xff] %v1241
  %1274 = vst [vmem:[%s2 + $0x90] sm:$0xff] %v1242
  %1275 = vst [vmem:[%s2 + $0x98] sm:$0xff] %v1243
  %1276 = vst [vmem:[%s2 + $0xa0] sm:$0xff] %v1244
  %1277 = vst [vmem:[%s2 + $0xa8] sm:$0xff] %v1245
  %1278 = vst [vmem:[%s2 + $0xb0] sm:$0xff] %v1246
  %1279 = vst [vmem:[%s2 + $0xb8] sm:$0xff] %v1247
  %1280 = vst [vmem:[%s2 + $0xc0] sm:$0xff] %v1248
  %1281 = vst [vmem:[%s2 + $0xc8] sm:$0xff] %v1249
  %1282 = vst [vmem:[%s2 + $0xd0] sm:$0xff] %v1250
  %1283 = vst [vmem:[%s2 + $0xd8] sm:$0xff] %v1251
  %1284 = vst [vmem:[%s2 + $0xe0] sm:$0xff] %v1252
  %1285 = vst [vmem:[%s2 + $0xe8] sm:$0xff] %v1253
  %1286 = vst [vmem:[%s2 + $0xf0] sm:$0xff] %v1254
  %1287 = vst [vmem:[%s2 + $0xf8] sm:$0xff] %v1255
  // Predicated region
  $region10: #{dropblock2d_forward.1} parent=0 // pred_check
    _
  $region11: #{dropblock2d_forward.1} parent=0 // pred_check_branch
    %1289 = sbr.rel (0) target = $region13
  $region12: #{dropblock2d_forward.1} parent=0 // pred_region
    _
  $region13: #{dropblock2d_forward.1} parent=0 // pred_fallthru
    _
  // Predicated region
  $region14: #{dropblock2d_forward.1} parent=0 // pred_check
    _
  $region15: #{dropblock2d_forward.1} parent=0 // pred_check_branch
    %1291 = sbr.rel (0) target = $region17
  $region16: #{dropblock2d_forward.1} parent=0 // pred_region
    _
  $region17: #{dropblock2d_forward.1} parent=0 // pred_fallthru
    _

</llo_original>
